<compile_context>
chip_gen: v7x
topology: tpu7x:2x2x1
jax: 0.10.0
libtpu: 0.0.40
codegen_flags: <defaults>
</compile_context>

<pallas_src>
import functools
import math

import jax
import jax.numpy as jnp
from jax.experimental import pallas as pl
from jax.experimental.pallas import tpu as pltpu

LANE = 128  # TPU lane width; one GRU gate per 128-lane slot


# ----------------------------- fused model kernel -----------------------------

def _gru_fused_kernel(x_ref,
                      w1_ref, b1_ref, w2_ref, b2_ref,
                      wih_ref, bih_ref, whh_ref, bhh_ref,
                      w3_ref, b3_ref, w4_ref, b4_ref,
                      out_ref, h_slab_ref,
                      *, obs, n_pad):
    f32 = jnp.float32
    rows = x_ref.shape[0]          # T * n_pad
    T = rows // n_pad

    # ---- encoder MLP: relu(pro1) -> relu(pro2), all rows at once ----
    x = x_ref[...]
    enc = jnp.dot(x, w1_ref[...], preferred_element_type=f32) + b1_ref[...]
    enc = jnp.maximum(enc, 0.0)
    enc = jnp.dot(enc, w2_ref[...], preferred_element_type=f32) + b2_ref[...]
    enc = jnp.maximum(enc, 0.0)                                  # (T*n_pad, H)

    # ---- hoisted GRU input projection: ONE dot, gates lane-packed ----
    gi = jnp.dot(enc, wih_ref[...], preferred_element_type=f32) + bih_ref[...]   # (T*n_pad, 3*LANE)

    whh = whh_ref[...]             # (LANE, 3*LANE); gate g in columns [g*LANE, g*LANE+H)
    bhh = bhh_ref[...]             # (1, 3*LANE)

    # ---- recurrence: one MXU issue per step, vreg-aligned gate slices ----
    # Hidden state carried at LANE width; real values in lanes [0, H), pad lanes stay 0.
    h = jnp.zeros((n_pad, LANE), f32)                            # h0 = 0 (nn.GRU default)
    for t in range(T):                                           # T is small & static
        lo = t * n_pad
        gi_t = gi[lo:lo + n_pad]                                 # sublane-aligned slice
        gh = jnp.dot(h, whh, preferred_element_type=f32) + bhh   # (n_pad, 3*LANE)
        # PyTorch gate order [reset; update; new]; b_hn sits inside the r-multiplied term.
        rz = jax.nn.sigmoid(gi_t[:, :2 * LANE] + gh[:, :2 * LANE])
        r = rz[:, :LANE]
        z = rz[:, LANE:]
        n = jnp.tanh(gi_t[:, 2 * LANE:] + r * gh[:, 2 * LANE:])
        h = (1.0 - z) * n + z * h
        h_slab_ref[lo:lo + n_pad, :] = h                         # tile-aligned scratch write

    # ---- decoder MLP (pro3 -> pro4, no activation) on predicted steps only ----
    h_pred = h_slab_ref[obs * n_pad:rows, :]                     # (pred*n_pad, LANE)
    mid = jnp.dot(h_pred, w3_ref[...], preferred_element_type=f32) + b3_ref[...]
    tra = jnp.dot(mid, w4_ref[...], preferred_element_type=f32) + b4_ref[...]     # (pred*n_pad, LANE)
    out_ref[...] = tra                                           # lane-dense store


# ----------------------------- wrapper -----------------------------

class GRUConfig:
    obs_length = 4
    pred_length = 4          # total seq = obs + pred
    feats_in = 4
    feats_out = 2
    feats_hidden = 32


def init_params(cfg, key):
    H = cfg.feats_hidden

    def lin_init(k, fout, fin):
        bound = 1.0 / math.sqrt(fin)
        kw, kb = jax.random.split(k)
        w = jax.random.uniform(kw, (fout, fin), jnp.float32, -bound, bound)
        b = jax.random.uniform(kb, (fout,), jnp.float32, -bound, bound)
        return w, b

    ks = jax.random.split(key, 6)
    params = {}
    params["pro1"] = lin_init(ks[0], H, cfg.feats_in)
    params["pro2"] = lin_init(ks[1], H, H)
    params["pro3"] = lin_init(ks[2], H // 2, H)
    params["pro4"] = lin_init(ks[3], cfg.feats_out, H // 2)

    bound = 1.0 / math.sqrt(H)
    kih, khh, kbi, kbh = jax.random.split(ks[4], 4)
    params["gru"] = (
        jax.random.uniform(kih, (3 * H, H), jnp.float32, -bound, bound),  # w_ih (PyTorch layout [r;z;n])
        jax.random.uniform(khh, (3 * H, H), jnp.float32, -bound, bound),  # w_hh
        jax.random.uniform(kbi, (3 * H,), jnp.float32, -bound, bound),    # b_ih
        jax.random.uniform(kbh, (3 * H,), jnp.float32, -bound, bound),    # b_hh
    )
    return params


def gru_model_forward(params, inputs0, cfg, iftrain=True):
    # inputs0: (T, N, F), time-major like the PyTorch module; iftrain unused (as in reference)
    T, N, _ = inputs0.shape
    H = cfg.feats_hidden
    Hh = H // 2
    obs = cfg.obs_length
    pred = T - obs
    fi, fo = cfg.feats_in, cfg.feats_out
    n_pad = max(8, -(-N // 8) * 8)                  # pad batch to a sublane multiple
    f32 = jnp.float32

    # ---- wrapper-side layout plumbing (fused by XLA, off the kernel critical path) ----
    # Slice features, zero future timesteps (teacher hidden), pad batch, flatten.
    batch = inputs0[:, :, :fi]
    batch_in = jnp.concatenate([batch[:obs], jnp.zeros_like(batch[obs:])], axis=0)
    batch_in = jnp.pad(batch_in, ((0, 0), (0, n_pad - N), (0, 0)))
    x2d = batch_in.reshape(T * n_pad, fi).astype(f32)

    w1, b1 = params["pro1"]
    w2, b2 = params["pro2"]
    w3, b3 = params["pro3"]
    w4, b4 = params["pro4"]
    w_ih, w_hh, b_ih, b_hh = params["gru"]

    w1t, b1r = w1.T, b1.reshape(1, H)
    w2t, b2r = w2.T, b2.reshape(1, H)

    # GRU gates lane-packed: gate g occupies lanes [g*LANE, g*LANE + H), rest zero.
    # Hidden state is carried at LANE width, so W_hh's contraction dim is LANE (zero-padded rows).
    wih_pack = jnp.zeros((H, 3 * LANE), f32)
    whh_pack = jnp.zeros((LANE, 3 * LANE), f32)
    bih_pack = jnp.zeros((1, 3 * LANE), f32)
    bhh_pack = jnp.zeros((1, 3 * LANE), f32)
    for g in range(3):
        wih_pack = wih_pack.at[:, g * LANE:g * LANE + H].set(w_ih[g * H:(g + 1) * H].T)
        whh_pack = whh_pack.at[:H, g * LANE:g * LANE + H].set(w_hh[g * H:(g + 1) * H].T)
        bih_pack = bih_pack.at[0, g * LANE:g * LANE + H].set(b_ih[g * H:(g + 1) * H])
        bhh_pack = bhh_pack.at[0, g * LANE:g * LANE + H].set(b_hh[g * H:(g + 1) * H])

    # Decoder: pad contraction rows (hidden carried at LANE width) and output lanes to 128.
    w3_pad = jnp.zeros((LANE, Hh), f32).at[:H, :].set(w3.T)
    b3r = b3.reshape(1, Hh)
    w4_pad = jnp.zeros((Hh, LANE), f32).at[:, :fo].set(w4.T)
    b4_pad = jnp.zeros((1, LANE), f32).at[0, :fo].set(b4)

    kernel = functools.partial(_gru_fused_kernel, obs=obs, n_pad=n_pad)

    tra = pl.pallas_call(
        kernel,
        out_shape=jax.ShapeDtypeStruct((pred * n_pad, LANE), f32),
        in_specs=[pl.BlockSpec(memory_space=pltpu.MemorySpace.VMEM) for _ in range(13)],
        out_specs=pl.BlockSpec(memory_space=pltpu.MemorySpace.VMEM),
        scratch_shapes=[pltpu.VMEM((T * n_pad, LANE), f32)],
        # single invocation, no grid: every operand is one resident VMEM block (~0.5 MiB total)
    )(x2d, w1t, b1r, w2t, b2r, wih_pack, bih_pack, whh_pack, bhh_pack,
      w3_pad, b3r, w4_pad, b4_pad)

    # Lane-dense kernel output -> trajectory; drop lane/batch padding in the wrapper (free).
    traj = tra[:, :fo].reshape(pred, n_pad, fo)[:, :N, :]

    # TODO(synk): Traj_loss is not defined in the reference file; implemented as MSE
    # (computed here on the tiny result so the kernel tail stays lane-dense, no XLU reduce).
    tar_y = inputs0[obs:, :, :fo].astype(f32)
    d = traj - tar_y
    loss = jnp.mean(d * d)
    return traj, loss


if __name__ == "__main__":
    cfg = GRUConfig()
    T = cfg.obs_length + cfg.pred_length   # 8
    N = 2                                  # batch (num agents)
    F = cfg.feats_in                       # raw feature dim of inputs[0]

    key = jax.random.PRNGKey(0)
    k_in, k_par = jax.random.split(key)
    inputs0 = jax.random.normal(k_in, (T, N, F), jnp.float32)
    params = init_params(cfg, k_par)

    traj, loss = gru_model_forward(params, inputs0, cfg, iftrain=True)
    traj = jax.block_until_ready(traj)
    loss = jax.block_until_ready(loss)

    assert traj.shape == (T - cfg.obs_length, N, cfg.feats_out)
    assert loss.shape == ()
    assert bool(jnp.isfinite(loss))
    print("KERNEL_OK")
</pallas_src>

<mosaic_0001>
module attributes {stable_mosaic.version = 11 : i64} {
  func.func @_gru_fused_kernel(%arg0: memref<64x4xf32, #tpu.memory_space<vmem>>, %arg1: memref<4x32xf32, #tpu.memory_space<vmem>>, %arg2: memref<1x32xf32, #tpu.memory_space<vmem>>, %arg3: memref<32x32xf32, #tpu.memory_space<vmem>>, %arg4: memref<1x32xf32, #tpu.memory_space<vmem>>, %arg5: memref<32x384xf32, #tpu.memory_space<vmem>>, %arg6: memref<1x384xf32, #tpu.memory_space<vmem>>, %arg7: memref<128x384xf32, #tpu.memory_space<vmem>>, %arg8: memref<1x384xf32, #tpu.memory_space<vmem>>, %arg9: memref<128x16xf32, #tpu.memory_space<vmem>>, %arg10: memref<1x16xf32, #tpu.memory_space<vmem>>, %arg11: memref<16x128xf32, #tpu.memory_space<vmem>>, %arg12: memref<1x128xf32, #tpu.memory_space<vmem>>, %arg13: memref<32x128xf32, #tpu.memory_space<vmem>>, %arg14: memref<64x128xf32, #tpu.memory_space<vmem>>) attributes {dimension_semantics = [], scalar_prefetch = 0 : i64, scratch_operands = 1 : i64, tpu.core_type = #tpu.core_type<tc>} {
    %c0 = arith.constant 0 : index
    %c0_0 = arith.constant 0 : index
    %0 = vector.load %arg0[%c0, %c0_0] : memref<64x4xf32, #tpu.memory_space<vmem>>, vector<64x4xf32>
    %c0_1 = arith.constant 0 : index
    %c0_2 = arith.constant 0 : index
    %1 = vector.load %arg1[%c0_1, %c0_2] : memref<4x32xf32, #tpu.memory_space<vmem>>, vector<4x32xf32>
    %cst = arith.constant dense<0.000000e+00> : vector<64x32xf32>
    %2 = tpu.matmul %0, %1, %cst {dimension_numbers = #tpu.dot_dimension_numbers<[1], [0], [0], [1], [0, 0, 1, 1], [], []>} : vector<64x4xf32>, vector<4x32xf32>, vector<64x32xf32> -> vector<64x32xf32>
    %c0_3 = arith.constant 0 : index
    %c0_4 = arith.constant 0 : index
    %3 = vector.load %arg2[%c0_3, %c0_4] : memref<1x32xf32, #tpu.memory_space<vmem>>, vector<1x32xf32>
    %4 = vector.broadcast %3 : vector<1x32xf32> to vector<64x32xf32>
    %5 = arith.addf %2, %4 : vector<64x32xf32>
    %cst_5 = arith.constant 0.000000e+00 : f32
    %6 = vector.broadcast %cst_5 : f32 to vector<64x32xf32>
    %7 = arith.maximumf %5, %6 : vector<64x32xf32>
    %c0_6 = arith.constant 0 : index
    %c0_7 = arith.constant 0 : index
    %8 = vector.load %arg3[%c0_6, %c0_7] : memref<32x32xf32, #tpu.memory_space<vmem>>, vector<32x32xf32>
    %cst_8 = arith.constant dense<0.000000e+00> : vector<64x32xf32>
    %9 = tpu.matmul %7, %8, %cst_8 {dimension_numbers = #tpu.dot_dimension_numbers<[1], [0], [0], [1], [0, 0, 1, 1], [], []>} : vector<64x32xf32>, vector<32x32xf32>, vector<64x32xf32> -> vector<64x32xf32>
    %c0_9 = arith.constant 0 : index
    %c0_10 = arith.constant 0 : index
    %10 = vector.load %arg4[%c0_9, %c0_10] : memref<1x32xf32, #tpu.memory_space<vmem>>, vector<1x32xf32>
    %11 = vector.broadcast %10 : vector<1x32xf32> to vector<64x32xf32>
    %12 = arith.addf %9, %11 : vector<64x32xf32>
    %cst_11 = arith.constant 0.000000e+00 : f32
    %13 = vector.broadcast %cst_11 : f32 to vector<64x32xf32>
    %14 = arith.maximumf %12, %13 : vector<64x32xf32>
    %c0_12 = arith.constant 0 : index
    %c0_13 = arith.constant 0 : index
    %15 = vector.load %arg5[%c0_12, %c0_13] : memref<32x384xf32, #tpu.memory_space<vmem>>, vector<32x384xf32>
    %cst_14 = arith.constant dense<0.000000e+00> : vector<64x384xf32>
    %16 = tpu.matmul %14, %15, %cst_14 {dimension_numbers = #tpu.dot_dimension_numbers<[1], [0], [0], [1], [0, 0, 1, 1], [], []>} : vector<64x32xf32>, vector<32x384xf32>, vector<64x384xf32> -> vector<64x384xf32>
    %c0_15 = arith.constant 0 : index
    %c0_16 = arith.constant 0 : index
    %17 = vector.load %arg6[%c0_15, %c0_16] : memref<1x384xf32, #tpu.memory_space<vmem>>, vector<1x384xf32>
    %18 = vector.broadcast %17 : vector<1x384xf32> to vector<64x384xf32>
    %19 = arith.addf %16, %18 : vector<64x384xf32>
    %c0_17 = arith.constant 0 : index
    %c0_18 = arith.constant 0 : index
    %20 = vector.load %arg7[%c0_17, %c0_18] : memref<128x384xf32, #tpu.memory_space<vmem>>, vector<128x384xf32>
    %c0_19 = arith.constant 0 : index
    %c0_20 = arith.constant 0 : index
    %21 = vector.load %arg8[%c0_19, %c0_20] : memref<1x384xf32, #tpu.memory_space<vmem>>, vector<1x384xf32>
    %cst_21 = arith.constant 0.000000e+00 : f32
    %22 = vector.broadcast %cst_21 : f32 to vector<8x128xf32>
    %23 = vector.extract_strided_slice %19 {offsets = [0, 0], sizes = [8, 384], strides = [1, 1]} : vector<64x384xf32> to vector<8x384xf32>
    %cst_22 = arith.constant dense<0.000000e+00> : vector<8x384xf32>
    %24 = tpu.matmul %22, %20, %cst_22 {dimension_numbers = #tpu.dot_dimension_numbers<[1], [0], [0], [1], [0, 0, 1, 1], [], []>} : vector<8x128xf32>, vector<128x384xf32>, vector<8x384xf32> -> vector<8x384xf32>
    %25 = vector.broadcast %21 : vector<1x384xf32> to vector<8x384xf32>
    %26 = arith.addf %24, %25 : vector<8x384xf32>
    %27 = vector.extract_strided_slice %23 {offsets = [0, 0], sizes = [8, 256], strides = [1, 1]} : vector<8x384xf32> to vector<8x256xf32>
    %28 = vector.extract_strided_slice %26 {offsets = [0, 0], sizes = [8, 256], strides = [1, 1]} : vector<8x384xf32> to vector<8x256xf32>
    %29 = arith.addf %27, %28 : vector<8x256xf32>
    %30 = arith.negf %29 : vector<8x256xf32>
    %31 = math.exp %30 : vector<8x256xf32>
    %cst_23 = arith.constant 1.000000e+00 : f32
    %32 = vector.broadcast %cst_23 : f32 to vector<8x256xf32>
    %33 = arith.addf %32, %31 : vector<8x256xf32>
    %34 = arith.divf %32, %33 : vector<8x256xf32>
    %35 = vector.extract_strided_slice %34 {offsets = [0, 0], sizes = [8, 128], strides = [1, 1]} : vector<8x256xf32> to vector<8x128xf32>
    %36 = vector.extract_strided_slice %34 {offsets = [0, 128], sizes = [8, 128], strides = [1, 1]} : vector<8x256xf32> to vector<8x128xf32>
    %37 = vector.extract_strided_slice %23 {offsets = [0, 256], sizes = [8, 128], strides = [1, 1]} : vector<8x384xf32> to vector<8x128xf32>
    %38 = vector.extract_strided_slice %26 {offsets = [0, 256], sizes = [8, 128], strides = [1, 1]} : vector<8x384xf32> to vector<8x128xf32>
    %39 = arith.mulf %35, %38 : vector<8x128xf32>
    %40 = arith.addf %37, %39 : vector<8x128xf32>
    %41 = math.tanh %40 : vector<8x128xf32>
    %cst_24 = arith.constant 1.000000e+00 : f32
    %42 = vector.broadcast %cst_24 : f32 to vector<8x128xf32>
    %43 = arith.subf %42, %36 : vector<8x128xf32>
    %44 = arith.mulf %43, %41 : vector<8x128xf32>
    %45 = arith.mulf %36, %22 : vector<8x128xf32>
    %46 = arith.addf %44, %45 : vector<8x128xf32>
    %c0_25 = arith.constant 0 : index
    %c0_26 = arith.constant 0 : index
    %47 = vector.load %arg14[%c0_25, %c0_26] : memref<64x128xf32, #tpu.memory_space<vmem>>, vector<8x128xf32>
    tpu.vector_store %arg14[%c0_25, %c0_26], %46 {strides = array<i32>} : memref<64x128xf32, #tpu.memory_space<vmem>>, vector<8x128xf32>,
    %48 = vector.extract_strided_slice %19 {offsets = [8, 0], sizes = [8, 384], strides = [1, 1]} : vector<64x384xf32> to vector<8x384xf32>
    %cst_27 = arith.constant dense<0.000000e+00> : vector<8x384xf32>
    %49 = tpu.matmul %46, %20, %cst_27 {dimension_numbers = #tpu.dot_dimension_numbers<[1], [0], [0], [1], [0, 0, 1, 1], [], []>} : vector<8x128xf32>, vector<128x384xf32>, vector<8x384xf32> -> vector<8x384xf32>
    %50 = vector.broadcast %21 : vector<1x384xf32> to vector<8x384xf32>
    %51 = arith.addf %49, %50 : vector<8x384xf32>
    %52 = vector.extract_strided_slice %48 {offsets = [0, 0], sizes = [8, 256], strides = [1, 1]} : vector<8x384xf32> to vector<8x256xf32>
    %53 = vector.extract_strided_slice %51 {offsets = [0, 0], sizes = [8, 256], strides = [1, 1]} : vector<8x384xf32> to vector<8x256xf32>
    %54 = arith.addf %52, %53 : vector<8x256xf32>
    %55 = arith.negf %54 : vector<8x256xf32>
    %56 = math.exp %55 : vector<8x256xf32>
    %cst_28 = arith.constant 1.000000e+00 : f32
    %57 = vector.broadcast %cst_28 : f32 to vector<8x256xf32>
    %58 = arith.addf %57, %56 : vector<8x256xf32>
    %59 = arith.divf %57, %58 : vector<8x256xf32>
    %60 = vector.extract_strided_slice %59 {offsets = [0, 0], sizes = [8, 128], strides = [1, 1]} : vector<8x256xf32> to vector<8x128xf32>
    %61 = vector.extract_strided_slice %59 {offsets = [0, 128], sizes = [8, 128], strides = [1, 1]} : vector<8x256xf32> to vector<8x128xf32>
    %62 = vector.extract_strided_slice %48 {offsets = [0, 256], sizes = [8, 128], strides = [1, 1]} : vector<8x384xf32> to vector<8x128xf32>
    %63 = vector.extract_strided_slice %51 {offsets = [0, 256], sizes = [8, 128], strides = [1, 1]} : vector<8x384xf32> to vector<8x128xf32>
    %64 = arith.mulf %60, %63 : vector<8x128xf32>
    %65 = arith.addf %62, %64 : vector<8x128xf32>
    %66 = math.tanh %65 : vector<8x128xf32>
    %cst_29 = arith.constant 1.000000e+00 : f32
    %67 = vector.broadcast %cst_29 : f32 to vector<8x128xf32>
    %68 = arith.subf %67, %61 : vector<8x128xf32>
    %69 = arith.mulf %68, %66 : vector<8x128xf32>
    %70 = arith.mulf %61, %46 : vector<8x128xf32>
    %71 = arith.addf %69, %70 : vector<8x128xf32>
    %c8 = arith.constant 8 : index
    %c0_30 = arith.constant 0 : index
    %72 = vector.load %arg14[%c8, %c0_30] : memref<64x128xf32, #tpu.memory_space<vmem>>, vector<8x128xf32>
    tpu.vector_store %arg14[%c8, %c0_30], %71 {strides = array<i32>} : memref<64x128xf32, #tpu.memory_space<vmem>>, vector<8x128xf32>,
    %73 = vector.extract_strided_slice %19 {offsets = [16, 0], sizes = [8, 384], strides = [1, 1]} : vector<64x384xf32> to vector<8x384xf32>
    %cst_31 = arith.constant dense<0.000000e+00> : vector<8x384xf32>
    %74 = tpu.matmul %71, %20, %cst_31 {dimension_numbers = #tpu.dot_dimension_numbers<[1], [0], [0], [1], [0, 0, 1, 1], [], []>} : vector<8x128xf32>, vector<128x384xf32>, vector<8x384xf32> -> vector<8x384xf32>
    %75 = vector.broadcast %21 : vector<1x384xf32> to vector<8x384xf32>
    %76 = arith.addf %74, %75 : vector<8x384xf32>
    %77 = vector.extract_strided_slice %73 {offsets = [0, 0], sizes = [8, 256], strides = [1, 1]} : vector<8x384xf32> to vector<8x256xf32>
    %78 = vector.extract_strided_slice %76 {offsets = [0, 0], sizes = [8, 256], strides = [1, 1]} : vector<8x384xf32> to vector<8x256xf32>
    %79 = arith.addf %77, %78 : vector<8x256xf32>
    %80 = arith.negf %79 : vector<8x256xf32>
    %81 = math.exp %80 : vector<8x256xf32>
    %cst_32 = arith.constant 1.000000e+00 : f32
    %82 = vector.broadcast %cst_32 : f32 to vector<8x256xf32>
    %83 = arith.addf %82, %81 : vector<8x256xf32>
    %84 = arith.divf %82, %83 : vector<8x256xf32>
    %85 = vector.extract_strided_slice %84 {offsets = [0, 0], sizes = [8, 128], strides = [1, 1]} : vector<8x256xf32> to vector<8x128xf32>
    %86 = vector.extract_strided_slice %84 {offsets = [0, 128], sizes = [8, 128], strides = [1, 1]} : vector<8x256xf32> to vector<8x128xf32>
    %87 = vector.extract_strided_slice %73 {offsets = [0, 256], sizes = [8, 128], strides = [1, 1]} : vector<8x384xf32> to vector<8x128xf32>
    %88 = vector.extract_strided_slice %76 {offsets = [0, 256], sizes = [8, 128], strides = [1, 1]} : vector<8x384xf32> to vector<8x128xf32>
    %89 = arith.mulf %85, %88 : vector<8x128xf32>
    %90 = arith.addf %87, %89 : vector<8x128xf32>
    %91 = math.tanh %90 : vector<8x128xf32>
    %cst_33 = arith.constant 1.000000e+00 : f32
    %92 = vector.broadcast %cst_33 : f32 to vector<8x128xf32>
    %93 = arith.subf %92, %86 : vector<8x128xf32>
    %94 = arith.mulf %93, %91 : vector<8x128xf32>
    %95 = arith.mulf %86, %71 : vector<8x128xf32>
    %96 = arith.addf %94, %95 : vector<8x128xf32>
    %c16 = arith.constant 16 : index
    %c0_34 = arith.constant 0 : index
    %97 = vector.load %arg14[%c16, %c0_34] : memref<64x128xf32, #tpu.memory_space<vmem>>, vector<8x128xf32>
    tpu.vector_store %arg14[%c16, %c0_34], %96 {strides = array<i32>} : memref<64x128xf32, #tpu.memory_space<vmem>>, vector<8x128xf32>,
    %98 = vector.extract_strided_slice %19 {offsets = [24, 0], sizes = [8, 384], strides = [1, 1]} : vector<64x384xf32> to vector<8x384xf32>
    %cst_35 = arith.constant dense<0.000000e+00> : vector<8x384xf32>
    %99 = tpu.matmul %96, %20, %cst_35 {dimension_numbers = #tpu.dot_dimension_numbers<[1], [0], [0], [1], [0, 0, 1, 1], [], []>} : vector<8x128xf32>, vector<128x384xf32>, vector<8x384xf32> -> vector<8x384xf32>
    %100 = vector.broadcast %21 : vector<1x384xf32> to vector<8x384xf32>
    %101 = arith.addf %99, %100 : vector<8x384xf32>
    %102 = vector.extract_strided_slice %98 {offsets = [0, 0], sizes = [8, 256], strides = [1, 1]} : vector<8x384xf32> to vector<8x256xf32>
    %103 = vector.extract_strided_slice %101 {offsets = [0, 0], sizes = [8, 256], strides = [1, 1]} : vector<8x384xf32> to vector<8x256xf32>
    %104 = arith.addf %102, %103 : vector<8x256xf32>
    %105 = arith.negf %104 : vector<8x256xf32>
    %106 = math.exp %105 : vector<8x256xf32>
    %cst_36 = arith.constant 1.000000e+00 : f32
    %107 = vector.broadcast %cst_36 : f32 to vector<8x256xf32>
    %108 = arith.addf %107, %106 : vector<8x256xf32>
    %109 = arith.divf %107, %108 : vector<8x256xf32>
    %110 = vector.extract_strided_slice %109 {offsets = [0, 0], sizes = [8, 128], strides = [1, 1]} : vector<8x256xf32> to vector<8x128xf32>
    %111 = vector.extract_strided_slice %109 {offsets = [0, 128], sizes = [8, 128], strides = [1, 1]} : vector<8x256xf32> to vector<8x128xf32>
    %112 = vector.extract_strided_slice %98 {offsets = [0, 256], sizes = [8, 128], strides = [1, 1]} : vector<8x384xf32> to vector<8x128xf32>
    %113 = vector.extract_strided_slice %101 {offsets = [0, 256], sizes = [8, 128], strides = [1, 1]} : vector<8x384xf32> to vector<8x128xf32>
    %114 = arith.mulf %110, %113 : vector<8x128xf32>
    %115 = arith.addf %112, %114 : vector<8x128xf32>
    %116 = math.tanh %115 : vector<8x128xf32>
    %cst_37 = arith.constant 1.000000e+00 : f32
    %117 = vector.broadcast %cst_37 : f32 to vector<8x128xf32>
    %118 = arith.subf %117, %111 : vector<8x128xf32>
    %119 = arith.mulf %118, %116 : vector<8x128xf32>
    %120 = arith.mulf %111, %96 : vector<8x128xf32>
    %121 = arith.addf %119, %120 : vector<8x128xf32>
    %c24 = arith.constant 24 : index
    %c0_38 = arith.constant 0 : index
    %122 = vector.load %arg14[%c24, %c0_38] : memref<64x128xf32, #tpu.memory_space<vmem>>, vector<8x128xf32>
    tpu.vector_store %arg14[%c24, %c0_38], %121 {strides = array<i32>} : memref<64x128xf32, #tpu.memory_space<vmem>>, vector<8x128xf32>,
    %123 = vector.extract_strided_slice %19 {offsets = [32, 0], sizes = [8, 384], strides = [1, 1]} : vector<64x384xf32> to vector<8x384xf32>
    %cst_39 = arith.constant dense<0.000000e+00> : vector<8x384xf32>
    %124 = tpu.matmul %121, %20, %cst_39 {dimension_numbers = #tpu.dot_dimension_numbers<[1], [0], [0], [1], [0, 0, 1, 1], [], []>} : vector<8x128xf32>, vector<128x384xf32>, vector<8x384xf32> -> vector<8x384xf32>
    %125 = vector.broadcast %21 : vector<1x384xf32> to vector<8x384xf32>
    %126 = arith.addf %124, %125 : vector<8x384xf32>
    %127 = vector.extract_strided_slice %123 {offsets = [0, 0], sizes = [8, 256], strides = [1, 1]} : vector<8x384xf32> to vector<8x256xf32>
    %128 = vector.extract_strided_slice %126 {offsets = [0, 0], sizes = [8, 256], strides = [1, 1]} : vector<8x384xf32> to vector<8x256xf32>
    %129 = arith.addf %127, %128 : vector<8x256xf32>
    %130 = arith.negf %129 : vector<8x256xf32>
    %131 = math.exp %130 : vector<8x256xf32>
    %cst_40 = arith.constant 1.000000e+00 : f32
    %132 = vector.broadcast %cst_40 : f32 to vector<8x256xf32>
    %133 = arith.addf %132, %131 : vector<8x256xf32>
    %134 = arith.divf %132, %133 : vector<8x256xf32>
    %135 = vector.extract_strided_slice %134 {offsets = [0, 0], sizes = [8, 128], strides = [1, 1]} : vector<8x256xf32> to vector<8x128xf32>
    %136 = vector.extract_strided_slice %134 {offsets = [0, 128], sizes = [8, 128], strides = [1, 1]} : vector<8x256xf32> to vector<8x128xf32>
    %137 = vector.extract_strided_slice %123 {offsets = [0, 256], sizes = [8, 128], strides = [1, 1]} : vector<8x384xf32> to vector<8x128xf32>
    %138 = vector.extract_strided_slice %126 {offsets = [0, 256], sizes = [8, 128], strides = [1, 1]} : vector<8x384xf32> to vector<8x128xf32>
    %139 = arith.mulf %135, %138 : vector<8x128xf32>
    %140 = arith.addf %137, %139 : vector<8x128xf32>
    %141 = math.tanh %140 : vector<8x128xf32>
    %cst_41 = arith.constant 1.000000e+00 : f32
    %142 = vector.broadcast %cst_41 : f32 to vector<8x128xf32>
    %143 = arith.subf %142, %136 : vector<8x128xf32>
    %144 = arith.mulf %143, %141 : vector<8x128xf32>
    %145 = arith.mulf %136, %121 : vector<8x128xf32>
    %146 = arith.addf %144, %145 : vector<8x128xf32>
    %c32 = arith.constant 32 : index
    %c0_42 = arith.constant 0 : index
    %147 = vector.load %arg14[%c32, %c0_42] : memref<64x128xf32, #tpu.memory_space<vmem>>, vector<8x128xf32>
    tpu.vector_store %arg14[%c32, %c0_42], %146 {strides = array<i32>} : memref<64x128xf32, #tpu.memory_space<vmem>>, vector<8x128xf32>,
    %148 = vector.extract_strided_slice %19 {offsets = [40, 0], sizes = [8, 384], strides = [1, 1]} : vector<64x384xf32> to vector<8x384xf32>
    %cst_43 = arith.constant dense<0.000000e+00> : vector<8x384xf32>
    %149 = tpu.matmul %146, %20, %cst_43 {dimension_numbers = #tpu.dot_dimension_numbers<[1], [0], [0], [1], [0, 0, 1, 1], [], []>} : vector<8x128xf32>, vector<128x384xf32>, vector<8x384xf32> -> vector<8x384xf32>
    %150 = vector.broadcast %21 : vector<1x384xf32> to vector<8x384xf32>
    %151 = arith.addf %149, %150 : vector<8x384xf32>
    %152 = vector.extract_strided_slice %148 {offsets = [0, 0], sizes = [8, 256], strides = [1, 1]} : vector<8x384xf32> to vector<8x256xf32>
    %153 = vector.extract_strided_slice %151 {offsets = [0, 0], sizes = [8, 256], strides = [1, 1]} : vector<8x384xf32> to vector<8x256xf32>
    %154 = arith.addf %152, %153 : vector<8x256xf32>
    %155 = arith.negf %154 : vector<8x256xf32>
    %156 = math.exp %155 : vector<8x256xf32>
    %cst_44 = arith.constant 1.000000e+00 : f32
    %157 = vector.broadcast %cst_44 : f32 to vector<8x256xf32>
    %158 = arith.addf %157, %156 : vector<8x256xf32>
    %159 = arith.divf %157, %158 : vector<8x256xf32>
    %160 = vector.extract_strided_slice %159 {offsets = [0, 0], sizes = [8, 128], strides = [1, 1]} : vector<8x256xf32> to vector<8x128xf32>
    %161 = vector.extract_strided_slice %159 {offsets = [0, 128], sizes = [8, 128], strides = [1, 1]} : vector<8x256xf32> to vector<8x128xf32>
    %162 = vector.extract_strided_slice %148 {offsets = [0, 256], sizes = [8, 128], strides = [1, 1]} : vector<8x384xf32> to vector<8x128xf32>
    %163 = vector.extract_strided_slice %151 {offsets = [0, 256], sizes = [8, 128], strides = [1, 1]} : vector<8x384xf32> to vector<8x128xf32>
    %164 = arith.mulf %160, %163 : vector<8x128xf32>
    %165 = arith.addf %162, %164 : vector<8x128xf32>
    %166 = math.tanh %165 : vector<8x128xf32>
    %cst_45 = arith.constant 1.000000e+00 : f32
    %167 = vector.broadcast %cst_45 : f32 to vector<8x128xf32>
    %168 = arith.subf %167, %161 : vector<8x128xf32>
    %169 = arith.mulf %168, %166 : vector<8x128xf32>
    %170 = arith.mulf %161, %146 : vector<8x128xf32>
    %171 = arith.addf %169, %170 : vector<8x128xf32>
    %c40 = arith.constant 40 : index
    %c0_46 = arith.constant 0 : index
    %172 = vector.load %arg14[%c40, %c0_46] : memref<64x128xf32, #tpu.memory_space<vmem>>, vector<8x128xf32>
    tpu.vector_store %arg14[%c40, %c0_46], %171 {strides = array<i32>} : memref<64x128xf32, #tpu.memory_space<vmem>>, vector<8x128xf32>,
    %173 = vector.extract_strided_slice %19 {offsets = [48, 0], sizes = [8, 384], strides = [1, 1]} : vector<64x384xf32> to vector<8x384xf32>
    %cst_47 = arith.constant dense<0.000000e+00> : vector<8x384xf32>
    %174 = tpu.matmul %171, %20, %cst_47 {dimension_numbers = #tpu.dot_dimension_numbers<[1], [0], [0], [1], [0, 0, 1, 1], [], []>} : vector<8x128xf32>, vector<128x384xf32>, vector<8x384xf32> -> vector<8x384xf32>
    %175 = vector.broadcast %21 : vector<1x384xf32> to vector<8x384xf32>
    %176 = arith.addf %174, %175 : vector<8x384xf32>
    %177 = vector.extract_strided_slice %173 {offsets = [0, 0], sizes = [8, 256], strides = [1, 1]} : vector<8x384xf32> to vector<8x256xf32>
    %178 = vector.extract_strided_slice %176 {offsets = [0, 0], sizes = [8, 256], strides = [1, 1]} : vector<8x384xf32> to vector<8x256xf32>
    %179 = arith.addf %177, %178 : vector<8x256xf32>
    %180 = arith.negf %179 : vector<8x256xf32>
    %181 = math.exp %180 : vector<8x256xf32>
    %cst_48 = arith.constant 1.000000e+00 : f32
    %182 = vector.broadcast %cst_48 : f32 to vector<8x256xf32>
    %183 = arith.addf %182, %181 : vector<8x256xf32>
    %184 = arith.divf %182, %183 : vector<8x256xf32>
    %185 = vector.extract_strided_slice %184 {offsets = [0, 0], sizes = [8, 128], strides = [1, 1]} : vector<8x256xf32> to vector<8x128xf32>
    %186 = vector.extract_strided_slice %184 {offsets = [0, 128], sizes = [8, 128], strides = [1, 1]} : vector<8x256xf32> to vector<8x128xf32>
    %187 = vector.extract_strided_slice %173 {offsets = [0, 256], sizes = [8, 128], strides = [1, 1]} : vector<8x384xf32> to vector<8x128xf32>
    %188 = vector.extract_strided_slice %176 {offsets = [0, 256], sizes = [8, 128], strides = [1, 1]} : vector<8x384xf32> to vector<8x128xf32>
    %189 = arith.mulf %185, %188 : vector<8x128xf32>
    %190 = arith.addf %187, %189 : vector<8x128xf32>
    %191 = math.tanh %190 : vector<8x128xf32>
    %cst_49 = arith.constant 1.000000e+00 : f32
    %192 = vector.broadcast %cst_49 : f32 to vector<8x128xf32>
    %193 = arith.subf %192, %186 : vector<8x128xf32>
    %194 = arith.mulf %193, %191 : vector<8x128xf32>
    %195 = arith.mulf %186, %171 : vector<8x128xf32>
    %196 = arith.addf %194, %195 : vector<8x128xf32>
    %c48 = arith.constant 48 : index
    %c0_50 = arith.constant 0 : index
    %197 = vector.load %arg14[%c48, %c0_50] : memref<64x128xf32, #tpu.memory_space<vmem>>, vector<8x128xf32>
    tpu.vector_store %arg14[%c48, %c0_50], %196 {strides = array<i32>} : memref<64x128xf32, #tpu.memory_space<vmem>>, vector<8x128xf32>,
    %198 = vector.extract_strided_slice %19 {offsets = [56, 0], sizes = [8, 384], strides = [1, 1]} : vector<64x384xf32> to vector<8x384xf32>
    %cst_51 = arith.constant dense<0.000000e+00> : vector<8x384xf32>
    %199 = tpu.matmul %196, %20, %cst_51 {dimension_numbers = #tpu.dot_dimension_numbers<[1], [0], [0], [1], [0, 0, 1, 1], [], []>} : vector<8x128xf32>, vector<128x384xf32>, vector<8x384xf32> -> vector<8x384xf32>
    %200 = vector.broadcast %21 : vector<1x384xf32> to vector<8x384xf32>
    %201 = arith.addf %199, %200 : vector<8x384xf32>
    %202 = vector.extract_strided_slice %198 {offsets = [0, 0], sizes = [8, 256], strides = [1, 1]} : vector<8x384xf32> to vector<8x256xf32>
    %203 = vector.extract_strided_slice %201 {offsets = [0, 0], sizes = [8, 256], strides = [1, 1]} : vector<8x384xf32> to vector<8x256xf32>
    %204 = arith.addf %202, %203 : vector<8x256xf32>
    %205 = arith.negf %204 : vector<8x256xf32>
    %206 = math.exp %205 : vector<8x256xf32>
    %cst_52 = arith.constant 1.000000e+00 : f32
    %207 = vector.broadcast %cst_52 : f32 to vector<8x256xf32>
    %208 = arith.addf %207, %206 : vector<8x256xf32>
    %209 = arith.divf %207, %208 : vector<8x256xf32>
    %210 = vector.extract_strided_slice %209 {offsets = [0, 0], sizes = [8, 128], strides = [1, 1]} : vector<8x256xf32> to vector<8x128xf32>
    %211 = vector.extract_strided_slice %209 {offsets = [0, 128], sizes = [8, 128], strides = [1, 1]} : vector<8x256xf32> to vector<8x128xf32>
    %212 = vector.extract_strided_slice %198 {offsets = [0, 256], sizes = [8, 128], strides = [1, 1]} : vector<8x384xf32> to vector<8x128xf32>
    %213 = vector.extract_strided_slice %201 {offsets = [0, 256], sizes = [8, 128], strides = [1, 1]} : vector<8x384xf32> to vector<8x128xf32>
    %214 = arith.mulf %210, %213 : vector<8x128xf32>
    %215 = arith.addf %212, %214 : vector<8x128xf32>
    %216 = math.tanh %215 : vector<8x128xf32>
    %cst_53 = arith.constant 1.000000e+00 : f32
    %217 = vector.broadcast %cst_53 : f32 to vector<8x128xf32>
    %218 = arith.subf %217, %211 : vector<8x128xf32>
    %219 = arith.mulf %218, %216 : vector<8x128xf32>
    %220 = arith.mulf %211, %196 : vector<8x128xf32>
    %221 = arith.addf %219, %220 : vector<8x128xf32>
    %c56 = arith.constant 56 : index
    %c0_54 = arith.constant 0 : index
    %222 = vector.load %arg14[%c56, %c0_54] : memref<64x128xf32, #tpu.memory_space<vmem>>, vector<8x128xf32>
    tpu.vector_store %arg14[%c56, %c0_54], %221 {strides = array<i32>} : memref<64x128xf32, #tpu.memory_space<vmem>>, vector<8x128xf32>,
    %c32_55 = arith.constant 32 : index
    %c0_56 = arith.constant 0 : index
    %223 = vector.load %arg14[%c32_55, %c0_56] : memref<64x128xf32, #tpu.memory_space<vmem>>, vector<32x128xf32>
    %c0_57 = arith.constant 0 : index
    %c0_58 = arith.constant 0 : index
    %224 = vector.load %arg9[%c0_57, %c0_58] : memref<128x16xf32, #tpu.memory_space<vmem>>, vector<128x16xf32>
    %cst_59 = arith.constant dense<0.000000e+00> : vector<32x16xf32>
    %225 = tpu.matmul %223, %224, %cst_59 {dimension_numbers = #tpu.dot_dimension_numbers<[1], [0], [0], [1], [0, 0, 1, 1], [], []>} : vector<32x128xf32>, vector<128x16xf32>, vector<32x16xf32> -> vector<32x16xf32>
    %c0_60 = arith.constant 0 : index
    %c0_61 = arith.constant 0 : index
    %226 = vector.load %arg10[%c0_60, %c0_61] : memref<1x16xf32, #tpu.memory_space<vmem>>, vector<1x16xf32>
    %227 = vector.broadcast %226 : vector<1x16xf32> to vector<32x16xf32>
    %228 = arith.addf %225, %227 : vector<32x16xf32>
    %c0_62 = arith.constant 0 : index
    %c0_63 = arith.constant 0 : index
    %229 = vector.load %arg11[%c0_62, %c0_63] : memref<16x128xf32, #tpu.memory_space<vmem>>, vector<16x128xf32>
    %cst_64 = arith.constant dense<0.000000e+00> : vector<32x128xf32>
    %230 = tpu.matmul %228, %229, %cst_64 {dimension_numbers = #tpu.dot_dimension_numbers<[1], [0], [0], [1], [0, 0, 1, 1], [], []>} : vector<32x16xf32>, vector<16x128xf32>, vector<32x128xf32> -> vector<32x128xf32>
    %c0_65 = arith.constant 0 : index
    %c0_66 = arith.constant 0 : index
    %231 = vector.load %arg12[%c0_65, %c0_66] : memref<1x128xf32, #tpu.memory_space<vmem>>, vector<1x128xf32>
    %232 = vector.broadcast %231 : vector<1x128xf32> to vector<32x128xf32>
    %233 = arith.addf %230, %232 : vector<32x128xf32>
    %c0_67 = arith.constant 0 : index
    %c0_68 = arith.constant 0 : index
    %234 = vector.load %arg13[%c0_67, %c0_68] : memref<32x128xf32, #tpu.memory_space<vmem>>, vector<32x128xf32>
    tpu.vector_store %arg13[%c0_67, %c0_68], %233 {strides = array<i32>} : memref<32x128xf32, #tpu.memory_space<vmem>>, vector<32x128xf32>,
    return
  }
}

</mosaic_0001>

<llo_original>
// kernel: tpu_custom_call.1
$region0: #{tpu_custom_call.1}
  #allocation0 [shape = 'u32[]', space=smem, size = 0x4, offset = 0x4, fixed_abs, tag = 'smem constant byte address 0x4 - core index']
  #allocation1 [shape = 'u32[144,128]{1,0:T(1,128)}', space=vmem, size = 0x12000, scoped, tag = 'internal scratch']
  #allocation2 [shape = 'f32[64,128]{1,0:T(8,128)}', space=vmem, size = 0x8000, scoped, tag = 'scratch operand']
  %s0 = inlined_call_operand.vmem [shape: f32[64,4], index: 0, kind: input, shape index: {}]
  %s1 = inlined_call_operand.vmem [shape: f32[4,32], index: 1, kind: input, shape index: {}]
  %s2 = inlined_call_operand.vmem [shape: f32[1,32], index: 2, kind: input, shape index: {}]
  %s3 = inlined_call_operand.vmem [shape: f32[32,32], index: 3, kind: input, shape index: {}]
  %s4 = inlined_call_operand.vmem [shape: f32[1,32], index: 4, kind: input, shape index: {}]
  %s5 = inlined_call_operand.vmem [shape: f32[32,384], index: 5, kind: input, shape index: {}]
  %s6 = inlined_call_operand.vmem [shape: f32[1,384], index: 6, kind: input, shape index: {}]
  %s7 = inlined_call_operand.hbm [shape: f32[128,384], index: 7, kind: input, shape index: {}]
  %s8 = inlined_call_operand.vmem [shape: f32[1,384], index: 8, kind: input, shape index: {}]
  %s9 = inlined_call_operand.vmem [shape: f32[128,16], index: 9, kind: input, shape index: {}]
  %s10 = inlined_call_operand.vmem [shape: f32[1,16], index: 10, kind: input, shape index: {}]
  %s11 = inlined_call_operand.vmem [shape: f32[16,128], index: 11, kind: input, shape index: {}]
  %s12 = inlined_call_operand.vmem [shape: f32[1,128], index: 12, kind: input, shape index: {}]
  %s13 = inlined_call_operand.hbm [shape: f32[32,128], index: 13, kind: output, shape index: {}]
  %s14 = sld [smem:[#allocation0]]
  $region66: #{tpu_custom_call.1} parent=0
    _
  %s16 = ssub.s32 1, %s14
  %s17 = scalar_select 0, %s16, %s14
  $region1: #{tpu_custom_call.1} parent=0
    #allocation3 [shape = 'u8[196608]{0}', space=vmem, size = 0x30000, scoped, tag = 'input window, operand 7, single buffered']
    #allocation4 [shape = 's32[1]{0}', space=sflag, size = 0x4, scoped, tag = 'scoped memory for tpu_custom_call.1']
    #allocation5 [shape = 's32[1]{0}', space=sflag, size = 0x4, scoped, tag = 'scoped memory for tpu_custom_call.1']
    #allocation6 [shape = 'u8[16384]{0}', space=vmem, size = 0x4000, scoped, tag = 'output window, operand 0, single buffered']
    %18 = vsyncpa [#allocation4], 0
    %19 = vsyncpa [#allocation5], 0
    // Predicated region
    $region2: #{tpu_custom_call.1} parent=1 // pred_check
      _
    $region3: #{tpu_custom_call.1} parent=1 // pred_check_branch
      %21 = sbr.rel (0) target = $region5
    $region4: #{tpu_custom_call.1} parent=1 // pred_region
      _
    $region5: #{tpu_custom_call.1} parent=1 // pred_fallthru
      _
    // Predicated region
    $region6: #{tpu_custom_call.1} parent=1 // pred_check
      _
    $region7: #{tpu_custom_call.1} parent=1 // pred_check_branch
      %23 = sbr.rel (0) target = $region9
    $region8: #{tpu_custom_call.1} parent=1 // pred_region
      _
    $region9: #{tpu_custom_call.1} parent=1 // pred_fallthru
      _
    // Predicated region
    $region10: #{tpu_custom_call.1} parent=1 // pred_check
      _
    $region11: #{tpu_custom_call.1} parent=1 // pred_check_branch
      %25 = sbr.rel (0) target = $region13
    $region12: #{tpu_custom_call.1} parent=1 // pred_region
      _
    $region13: #{tpu_custom_call.1} parent=1 // pred_fallthru
      _
    // Predicated region
    $region14: #{tpu_custom_call.1} parent=1 // pred_check
      _
    $region15: #{tpu_custom_call.1} parent=1 // pred_check_branch
      %27 = sbr.rel (0) target = $region17
    $region16: #{tpu_custom_call.1} parent=1 // pred_region
      _
    $region17: #{tpu_custom_call.1} parent=1 // pred_fallthru
      _
    // Predicated region
    $region18: #{tpu_custom_call.1} parent=1 // pred_check
      _
    $region19: #{tpu_custom_call.1} parent=1 // pred_check_branch
      %29 = sbr.rel (0) target = $region21
    $region20: #{tpu_custom_call.1} parent=1 // pred_region
      _
    $region21: #{tpu_custom_call.1} parent=1 // pred_fallthru
      _
    // Predicated region
    $region22: #{tpu_custom_call.1} parent=1 // pred_check
      _
    $region23: #{tpu_custom_call.1} parent=1 // pred_check_branch
      %31 = sbr.rel (0) target = $region25
    $region24: #{tpu_custom_call.1} parent=1 // pred_region
      _
    $region25: #{tpu_custom_call.1} parent=1 // pred_fallthru
      _
    // Predicated region
    $region26: #{tpu_custom_call.1} parent=1 // pred_check
      _
    $region27: #{tpu_custom_call.1} parent=1 // pred_check_branch
      %33 = sbr.rel (0) target = $region29
    $region28: #{tpu_custom_call.1} parent=1 // pred_region
      _
    $region29: #{tpu_custom_call.1} parent=1 // pred_fallthru
      _
    // Predicated region
    $region30: #{tpu_custom_call.1} parent=1 // pred_check
      _
    $region31: #{tpu_custom_call.1} parent=1 // pred_check_branch
      %35 = sbr.rel (0) target = $region33
    $region32: #{tpu_custom_call.1} parent=1 // pred_region
      %s37 = ssub.s32 6144, 6144
      %38 = vsyncadd [#allocation4], %s37
      %s39 = sshll.u32 [#allocation3], 4
      %s40 = int_to_ptr.vmem [resolvable:$true] %s39
      %45 = dma.hbm_to_vmem [thread:$0]  %s7, 6144, %s40, [#allocation4], 384, 384, 24
    $region33: #{tpu_custom_call.1} parent=1 // pred_fallthru
      _
    // Predicated region
    $region34: #{tpu_custom_call.1} parent=1 // pred_check
      _
    $region35: #{tpu_custom_call.1} parent=1 // pred_check_branch
      %47 = sbr.rel (0) target = $region37
    $region36: #{tpu_custom_call.1} parent=1 // pred_region
      _
    $region37: #{tpu_custom_call.1} parent=1 // pred_fallthru
      _
    // Predicated region
    $region38: #{tpu_custom_call.1} parent=1 // pred_check
      _
    $region39: #{tpu_custom_call.1} parent=1 // pred_check_branch
      %49 = sbr.rel (0) target = $region41
    $region40: #{tpu_custom_call.1} parent=1 // pred_region
      _
    $region41: #{tpu_custom_call.1} parent=1 // pred_fallthru
      _
    // Predicated region
    $region42: #{tpu_custom_call.1} parent=1 // pred_check
      _
    $region43: #{tpu_custom_call.1} parent=1 // pred_check_branch
      %51 = sbr.rel (0) target = $region45
    $region44: #{tpu_custom_call.1} parent=1 // pred_region
      _
    $region45: #{tpu_custom_call.1} parent=1 // pred_fallthru
      _
    // Predicated region
    $region46: #{tpu_custom_call.1} parent=1 // pred_check
      _
    $region47: #{tpu_custom_call.1} parent=1 // pred_check_branch
      %53 = sbr.rel (0) target = $region49
    $region48: #{tpu_custom_call.1} parent=1 // pred_region
      _
    $region49: #{tpu_custom_call.1} parent=1 // pred_fallthru
      _
    // Predicated region
    $region50: #{tpu_custom_call.1} parent=1 // pred_check
      _
    $region51: #{tpu_custom_call.1} parent=1 // pred_check_branch
      %55 = sbr.rel (0) target = $region53
    $region52: #{tpu_custom_call.1} parent=1 // pred_region
      _
    $region53: #{tpu_custom_call.1} parent=1 // pred_fallthru
      _
    // Predicated region
    $region54: #{tpu_custom_call.1} parent=1 // pred_check
      _
    $region55: #{tpu_custom_call.1} parent=1 // pred_check_branch
      %57 = sbr.rel (0) target = $region57
    $region56: #{tpu_custom_call.1} parent=1 // pred_region
      %58 = dma.done [#allocation4], 6144
    $region57: #{tpu_custom_call.1} parent=1 // pred_fallthru
      _
    %v59 = vld [vmem:[%s0] sm:$0xff]
    %v60 = vld [vmem:[%s0 + $0x8] sm:$0xff]
    %v61 = vld [vmem:[%s0 + $0x10] sm:$0xff]
    %v62 = vld [vmem:[%s0 + $0x18] sm:$0xff]
    %v63 = vld [vmem:[%s0 + $0x20] sm:$0xff]
    %v64 = vld [vmem:[%s0 + $0x28] sm:$0xff]
    %v65 = vld [vmem:[%s0 + $0x30] sm:$0xff]
    %v66 = vld [vmem:[%s0 + $0x38] sm:$0xff]
    %v67 = vld [vmem:[%s1] sm:$0xf]
    %v68 = vld [vmem:[%s2] sm:$0x1]
    %v70 = vlaneseq
    %v71 = vshrl.u32 %v70, 7
    %v72 = vsub.s32 0, %v71
    %v73 = vrot.slane %v68, %v72
    %vm75 = vcmask 31744
    %v77 = vsel %vm75, %v59, 0
    %v80 = vsel %vm75, %v60, 0
    %v83 = vsel %vm75, %v61, 0
    %v86 = vsel %vm75, %v62, 0
    %v89 = vsel %vm75, %v63, 0
    %v92 = vsel %vm75, %v64, 0
    %v95 = vsel %vm75, %v65, 0
    %v98 = vsel %vm75, %v66, 0
    %vm100 = vcmask 1043456
    %v102 = vsel %vm100, %v67, 0
    %104 = vmatprep.subr.mxu0 0.0
    %105 = vmatpush1.msra.mxu0 %v102
    %106 = vmatprep.subr.mxu0 0.0
    %107 = vmatpush1.msra.mxu0 0.0
    %108 = vmatprep.subr.mxu0 0.0
    %109 = vmatpush1.msra.mxu0 0.0
    %110 = vmatprep.subr.mxu0 0.0
    %111 = vmatpush1.msra.mxu0 0.0
    %112 = vmatprep.subr.mxu0 0.0
    %113 = vmatpush1.msra.mxu0 0.0
    %114 = vmatprep.subr.mxu0 0.0
    %115 = vmatpush1.msra.mxu0 0.0
    %116 = vmatprep.subr.mxu0 0.0
    %117 = vmatpush1.msra.mxu0 0.0
    %118 = vmatprep.subr.mxu0 0.0
    %119 = vmatpush1.msra.mxu0 0.0
    %120 = vmatprep.subr.mxu0 0.0
    %121 = vmatpush1.msra.mxu0 0.0
    %122 = vmatprep.subr.mxu0 0.0
    %123 = vmatpush1.msra.mxu0 0.0
    %124 = vmatprep.subr.mxu0 0.0
    %125 = vmatpush1.msra.mxu0 0.0
    %126 = vmatprep.subr.mxu0 0.0
    %127 = vmatpush1.msra.mxu0 0.0
    %128 = vmatprep.subr.mxu0 0.0
    %129 = vmatpush1.msra.mxu0 0.0
    %130 = vmatprep.subr.mxu0 0.0
    %131 = vmatpush1.msra.mxu0 0.0
    %132 = vmatprep.subr.mxu0 0.0
    %133 = vmatpush1.msra.mxu0 0.0
    %134 = vmatprep.subr.mxu0 0.0
    %135 = vmatpush1.msra.mxu0 0.0
    %136 = vmatprep.subr.mxu0 0.0
    %137 = vmatpush1.msra.mxu0 0.0
    %138 = vmatprep.subr.mxu0 0.0
    %139 = vmatpush1.msra.mxu0 0.0
    %140 = vmatprep.subr.mxu0 0.0
    %141 = vmatpush1.msra.mxu0 0.0
    %142 = vmatprep.subr.mxu0 0.0
    %143 = vmatpush1.msra.mxu0 0.0
    %144 = vmatprep.subr.mxu0 0.0
    %145 = vmatpush1.msra.mxu0 0.0
    %146 = vmatprep.subr.mxu0 0.0
    %147 = vmatpush1.msra.mxu0 0.0
    %148 = vmatprep.subr.mxu0 0.0
    %149 = vmatpush1.msra.mxu0 0.0
    %150 = vmatprep.subr.mxu0 0.0
    %151 = vmatpush1.msra.mxu0 0.0
    %152 = vmatprep.subr.mxu0 0.0
    %153 = vmatpush1.msra.mxu0 0.0
    %154 = vmatprep.subr.mxu0 0.0
    %155 = vmatpush1.msra.mxu0 0.0
    %156 = vmatprep.subr.mxu0 0.0
    %157 = vmatpush1.msra.mxu0 0.0
    %158 = vmatprep.subr.mxu0 0.0
    %159 = vmatpush1.msra.mxu0 0.0
    %160 = vmatprep.subr.mxu0 0.0
    %161 = vmatpush1.msra.mxu0 0.0
    %162 = vmatprep.subr.mxu0 0.0
    %163 = vmatpush1.msra.mxu0 0.0
    %164 = vmatprep.subr.mxu0 0.0
    %165 = vmatpush1.msra.mxu0 0.0
    %166 = vmatprep.subr.mxu0 0.0
    %167 = vmatpush1.msra.mxu0 0.0
    %168 = vmatprep.mubr.f32.mxu0 0.0
    %169 = vmatmul.mubr.f32.gmra.mrb[0].mxu0 %v77
    %v170 = vpop.f32.mrb[0].mxu0
    %v171 = vadd.f32 %v73, %v170
    %v172 = vpop.f32.mrb[0].mxu0
    %173 = vmatprep.mubr.f32.mxu0 0.0
    %174 = vmatmul.mubr.f32.gmra.mrb[0].mxu0 %v80
    %v175 = vpop.f32.mrb[0].mxu0
    %v176 = vadd.f32 %v73, %v175
    %v177 = vpop.f32.mrb[0].mxu0
    %178 = vmatprep.mubr.f32.mxu0 0.0
    %179 = vmatmul.mubr.f32.gmra.mrb[0].mxu0 %v83
    %v180 = vpop.f32.mrb[0].mxu0
    %v181 = vadd.f32 %v73, %v180
    %v182 = vpop.f32.mrb[0].mxu0
    %183 = vmatprep.mubr.f32.mxu0 0.0
    %184 = vmatmul.mubr.f32.gmra.mrb[0].mxu0 %v86
    %v185 = vpop.f32.mrb[0].mxu0
    %v186 = vadd.f32 %v73, %v185
    %v187 = vpop.f32.mrb[0].mxu0
    %188 = vmatprep.mubr.f32.mxu0 0.0
    %189 = vmatmul.mubr.f32.gmra.mrb[0].mxu0 %v89
    %v190 = vpop.f32.mrb[0].mxu0
    %v191 = vadd.f32 %v73, %v190
    %v192 = vpop.f32.mrb[0].mxu0
    %193 = vmatprep.mubr.f32.mxu0 0.0
    %194 = vmatmul.mubr.f32.gmra.mrb[0].mxu0 %v92
    %v195 = vpop.f32.mrb[0].mxu0
    %v196 = vadd.f32 %v73, %v195
    %v197 = vpop.f32.mrb[0].mxu0
    %198 = vmatprep.mubr.f32.mxu0 0.0
    %199 = vmatmul.mubr.f32.gmra.mrb[0].mxu0 %v95
    %v200 = vpop.f32.mrb[0].mxu0
    %v201 = vadd.f32 %v73, %v200
    %v202 = vpop.f32.mrb[0].mxu0
    %203 = vmatprep.mubr.f32.mxu0 0.0
    %204 = vmatmul.mubr.f32.gmra.mrb[0].mxu0 %v98
    %v205 = vpop.f32.mrb[0].mxu0
    %v206 = vadd.f32 %v73, %v205
    %v207 = vpop.f32.mrb[0].mxu0
    %208 = vdwg.mxu0
    %v209 = vmax.f32 %v171, 0.0
    %v210 = vmax.f32 %v176, 0.0
    %v211 = vmax.f32 %v181, 0.0
    %v212 = vmax.f32 %v186, 0.0
    %v213 = vmax.f32 %v191, 0.0
    %v214 = vmax.f32 %v196, 0.0
    %v215 = vmax.f32 %v201, 0.0
    %v216 = vmax.f32 %v206, 0.0
    %v217 = vld [vmem:[%s3] sm:$0xff]
    %v218 = vld [vmem:[%s3 + $0x8] sm:$0xff]
    %v219 = vld [vmem:[%s3 + $0x10] sm:$0xff]
    %v220 = vld [vmem:[%s3 + $0x18] sm:$0xff]
    %v221 = vld [vmem:[%s4] sm:$0x1]
    %v223 = vlaneseq
    %v224 = vshrl.u32 %v223, 7
    %v225 = vsub.s32 0, %v224
    %v226 = vrot.slane %v221, %v225
    %vm228 = vcmask 261120
    %v230 = vsel %vm228, %v209, 0
    %v233 = vsel %vm228, %v210, 0
    %v236 = vsel %vm228, %v211, 0
    %v239 = vsel %vm228, %v212, 0
    %v242 = vsel %vm228, %v213, 0
    %v245 = vsel %vm228, %v214, 0
    %v248 = vsel %vm228, %v215, 0
    %v251 = vsel %vm228, %v216, 0
    %253 = vmatprep.subr.mxu0 0.0
    %254 = vmatpush1.msra.mxu0 %v217
    %255 = vmatprep.subr.mxu0 0.0
    %256 = vmatpush1.msra.mxu0 %v218
    %257 = vmatprep.subr.mxu0 0.0
    %258 = vmatpush1.msra.mxu0 %v219
    %259 = vmatprep.subr.mxu0 0.0
    %260 = vmatpush1.msra.mxu0 %v220
    %261 = vmatprep.subr.mxu0 0.0
    %262 = vmatpush1.msra.mxu0 0.0
    %263 = vmatprep.subr.mxu0 0.0
    %264 = vmatpush1.msra.mxu0 0.0
    %265 = vmatprep.subr.mxu0 0.0
    %266 = vmatpush1.msra.mxu0 0.0
    %267 = vmatprep.subr.mxu0 0.0
    %268 = vmatpush1.msra.mxu0 0.0
    %269 = vmatprep.subr.mxu0 0.0
    %270 = vmatpush1.msra.mxu0 0.0
    %271 = vmatprep.subr.mxu0 0.0
    %272 = vmatpush1.msra.mxu0 0.0
    %273 = vmatprep.subr.mxu0 0.0
    %274 = vmatpush1.msra.mxu0 0.0
    %275 = vmatprep.subr.mxu0 0.0
    %276 = vmatpush1.msra.mxu0 0.0
    %277 = vmatprep.subr.mxu0 0.0
    %278 = vmatpush1.msra.mxu0 0.0
    %279 = vmatprep.subr.mxu0 0.0
    %280 = vmatpush1.msra.mxu0 0.0
    %281 = vmatprep.subr.mxu0 0.0
    %282 = vmatpush1.msra.mxu0 0.0
    %283 = vmatprep.subr.mxu0 0.0
    %284 = vmatpush1.msra.mxu0 0.0
    %285 = vmatprep.subr.mxu0 0.0
    %286 = vmatpush1.msra.mxu0 0.0
    %287 = vmatprep.subr.mxu0 0.0
    %288 = vmatpush1.msra.mxu0 0.0
    %289 = vmatprep.subr.mxu0 0.0
    %290 = vmatpush1.msra.mxu0 0.0
    %291 = vmatprep.subr.mxu0 0.0
    %292 = vmatpush1.msra.mxu0 0.0
    %293 = vmatprep.subr.mxu0 0.0
    %294 = vmatpush1.msra.mxu0 0.0
    %295 = vmatprep.subr.mxu0 0.0
    %296 = vmatpush1.msra.mxu0 0.0
    %297 = vmatprep.subr.mxu0 0.0
    %298 = vmatpush1.msra.mxu0 0.0
    %299 = vmatprep.subr.mxu0 0.0
    %300 = vmatpush1.msra.mxu0 0.0
    %301 = vmatprep.subr.mxu0 0.0
    %302 = vmatpush1.msra.mxu0 0.0
    %303 = vmatprep.subr.mxu0 0.0
    %304 = vmatpush1.msra.mxu0 0.0
    %305 = vmatprep.subr.mxu0 0.0
    %306 = vmatpush1.msra.mxu0 0.0
    %307 = vmatprep.subr.mxu0 0.0
    %308 = vmatpush1.msra.mxu0 0.0
    %309 = vmatprep.subr.mxu0 0.0
    %310 = vmatpush1.msra.mxu0 0.0
    %311 = vmatprep.subr.mxu0 0.0
    %312 = vmatpush1.msra.mxu0 0.0
    %313 = vmatprep.subr.mxu0 0.0
    %314 = vmatpush1.msra.mxu0 0.0
    %315 = vmatprep.subr.mxu0 0.0
    %316 = vmatpush1.msra.mxu0 0.0
    %317 = vmatprep.mubr.f32.mxu0 0.0
    %318 = vmatmul.mubr.f32.gmra.mrb[0].mxu0 %v230
    %v319 = vpop.f32.mrb[0].mxu0
    %v320 = vadd.f32 %v226, %v319
    %v321 = vpop.f32.mrb[0].mxu0
    %322 = vmatprep.mubr.f32.mxu0 0.0
    %323 = vmatmul.mubr.f32.gmra.mrb[0].mxu0 %v233
    %v324 = vpop.f32.mrb[0].mxu0
    %v325 = vadd.f32 %v226, %v324
    %v326 = vpop.f32.mrb[0].mxu0
    %327 = vmatprep.mubr.f32.mxu0 0.0
    %328 = vmatmul.mubr.f32.gmra.mrb[0].mxu0 %v236
    %v329 = vpop.f32.mrb[0].mxu0
    %v330 = vadd.f32 %v226, %v329
    %v331 = vpop.f32.mrb[0].mxu0
    %332 = vmatprep.mubr.f32.mxu0 0.0
    %333 = vmatmul.mubr.f32.gmra.mrb[0].mxu0 %v239
    %v334 = vpop.f32.mrb[0].mxu0
    %v335 = vadd.f32 %v226, %v334
    %v336 = vpop.f32.mrb[0].mxu0
    %337 = vmatprep.mubr.f32.mxu0 0.0
    %338 = vmatmul.mubr.f32.gmra.mrb[0].mxu0 %v242
    %v339 = vpop.f32.mrb[0].mxu0
    %v340 = vadd.f32 %v226, %v339
    %v341 = vpop.f32.mrb[0].mxu0
    %342 = vmatprep.mubr.f32.mxu0 0.0
    %343 = vmatmul.mubr.f32.gmra.mrb[0].mxu0 %v245
    %v344 = vpop.f32.mrb[0].mxu0
    %v345 = vadd.f32 %v226, %v344
    %v346 = vpop.f32.mrb[0].mxu0
    %347 = vmatprep.mubr.f32.mxu0 0.0
    %348 = vmatmul.mubr.f32.gmra.mrb[0].mxu0 %v248
    %v349 = vpop.f32.mrb[0].mxu0
    %v350 = vadd.f32 %v226, %v349
    %v351 = vpop.f32.mrb[0].mxu0
    %352 = vmatprep.mubr.f32.mxu0 0.0
    %353 = vmatmul.mubr.f32.gmra.mrb[0].mxu0 %v251
    %v354 = vpop.f32.mrb[0].mxu0
    %v355 = vadd.f32 %v226, %v354
    %v356 = vpop.f32.mrb[0].mxu0
    %357 = vdwg.mxu0
    %v358 = vmax.f32 %v320, 0.0
    %v359 = vmax.f32 %v325, 0.0
    %v360 = vmax.f32 %v330, 0.0
    %v361 = vmax.f32 %v335, 0.0
    %v362 = vmax.f32 %v340, 0.0
    %v363 = vmax.f32 %v345, 0.0
    %v364 = vmax.f32 %v350, 0.0
    %v365 = vmax.f32 %v355, 0.0
    %v366 = vld [vmem:[%s5] sm:$0xff]
    %v367 = vld [vmem:[%s5 + $0x8] sm:$0xff]
    %v368 = vld [vmem:[%s5 + $0x10] sm:$0xff]
    %v369 = vld [vmem:[%s5 + $0x18] sm:$0xff]
    %v370 = vld [vmem:[%s5 + $0x20] sm:$0xff]
    %v371 = vld [vmem:[%s5 + $0x28] sm:$0xff]
    %v372 = vld [vmem:[%s5 + $0x30] sm:$0xff]
    %v373 = vld [vmem:[%s5 + $0x38] sm:$0xff]
    %v374 = vld [vmem:[%s5 + $0x40] sm:$0xff]
    %v375 = vld [vmem:[%s5 + $0x48] sm:$0xff]
    %v376 = vld [vmem:[%s5 + $0x50] sm:$0xff]
    %v377 = vld [vmem:[%s5 + $0x58] sm:$0xff]
    %v378 = vld [vmem:[%s6] sm:$0x7]
    %v380 = vlaneseq
    %v381 = vshrl.u32 %v380, 7
    %v382 = vsub.s32 0, %v381
    %v383 = vrot.slane %v378, %v382
    %v384 = vlaneseq
    %v385 = vshrl.u32 %v384, 7
    %v386 = vsub.s32 1, %v385
    %v387 = vrot.slane %v378, %v386
    %v388 = vlaneseq
    %v389 = vshrl.u32 %v388, 7
    %v390 = vsub.s32 2, %v389
    %v391 = vrot.slane %v378, %v390
    %v396 = vsel %vm228, %v358, 0
    %v399 = vsel %vm228, %v359, 0
    %v402 = vsel %vm228, %v360, 0
    %v405 = vsel %vm228, %v361, 0
    %v408 = vsel %vm228, %v362, 0
    %v411 = vsel %vm228, %v363, 0
    %v414 = vsel %vm228, %v364, 0
    %v417 = vsel %vm228, %v365, 0
    %419 = vmatprep.subr.mxu0 %v367
    %420 = vmatpush1.msra.mxu0 %v366
    %421 = vmatprep.subr.mxu0 %v370
    %422 = vmatpush1.msra.mxu0 %v369
    %423 = vmatprep.subr.mxu0 %v373
    %424 = vmatpush1.msra.mxu0 %v372
    %425 = vmatprep.subr.mxu0 %v376
    %426 = vmatpush1.msra.mxu0 %v375
    %427 = vmatprep.subr.mxu0 0.0
    %428 = vmatpush1.msra.mxu0 0.0
    %429 = vmatprep.subr.mxu0 0.0
    %430 = vmatpush1.msra.mxu0 0.0
    %431 = vmatprep.subr.mxu0 0.0
    %432 = vmatpush1.msra.mxu0 0.0
    %433 = vmatprep.subr.mxu0 0.0
    %434 = vmatpush1.msra.mxu0 0.0
    %435 = vmatprep.subr.mxu0 0.0
    %436 = vmatpush1.msra.mxu0 0.0
    %437 = vmatprep.subr.mxu0 0.0
    %438 = vmatpush1.msra.mxu0 0.0
    %439 = vmatprep.subr.mxu0 0.0
    %440 = vmatpush1.msra.mxu0 0.0
    %441 = vmatprep.subr.mxu0 0.0
    %442 = vmatpush1.msra.mxu0 0.0
    %443 = vmatprep.subr.mxu0 0.0
    %444 = vmatpush1.msra.mxu0 0.0
    %445 = vmatprep.subr.mxu0 0.0
    %446 = vmatpush1.msra.mxu0 0.0
    %447 = vmatprep.subr.mxu0 0.0
    %448 = vmatpush1.msra.mxu0 0.0
    %449 = vmatprep.subr.mxu0 0.0
    %450 = vmatpush1.msra.mxu0 0.0
    %451 = vmatprep.subr.mxu0 0.0
    %452 = vmatpush1.msra.mxu0 0.0
    %453 = vmatprep.subr.mxu0 0.0
    %454 = vmatpush1.msra.mxu0 0.0
    %455 = vmatprep.subr.mxu0 0.0
    %456 = vmatpush1.msra.mxu0 0.0
    %457 = vmatprep.subr.mxu0 0.0
    %458 = vmatpush1.msra.mxu0 0.0
    %459 = vmatprep.subr.mxu0 0.0
    %460 = vmatpush1.msra.mxu0 0.0
    %461 = vmatprep.subr.mxu0 0.0
    %462 = vmatpush1.msra.mxu0 0.0
    %463 = vmatprep.subr.mxu0 0.0
    %464 = vmatpush1.msra.mxu0 0.0
    %465 = vmatprep.subr.mxu0 0.0
    %466 = vmatpush1.msra.mxu0 0.0
    %467 = vmatprep.subr.mxu0 0.0
    %468 = vmatpush1.msra.mxu0 0.0
    %469 = vmatprep.subr.mxu0 0.0
    %470 = vmatpush1.msra.mxu0 0.0
    %471 = vmatprep.subr.mxu0 0.0
    %472 = vmatpush1.msra.mxu0 0.0
    %473 = vmatprep.subr.mxu0 0.0
    %474 = vmatpush1.msra.mxu0 0.0
    %475 = vmatprep.subr.mxu0 0.0
    %476 = vmatpush1.msra.mxu0 0.0
    %477 = vmatprep.subr.mxu0 0.0
    %478 = vmatpush1.msra.mxu0 0.0
    %479 = vmatprep.subr.mxu0 0.0
    %480 = vmatpush1.msra.mxu0 0.0
    %481 = vmatprep.subr.mxu0 0.0
    %482 = vmatpush1.msra.mxu0 0.0
    %483 = vmatprep.mubr.f32.mxu0 0.0
    %484 = vmatmul.mubr.f32.gmra.mrb[0].mxu0 %v396
    %v485 = vpop.f32.mrb[0].mxu0
    %v486 = vadd.f32 %v383, %v485
    %v487 = vpop.f32.mrb[0].mxu0
    %v488 = vadd.f32 %v387, %v487
    %489 = vmatprep.mubr.f32.mxu0 0.0
    %490 = vmatmul.mubr.f32.gmra.mrb[0].mxu0 %v399
    %v491 = vpop.f32.mrb[0].mxu0
    %v492 = vadd.f32 %v383, %v491
    %v493 = vpop.f32.mrb[0].mxu0
    %v494 = vadd.f32 %v387, %v493
    %495 = vmatprep.mubr.f32.mxu0 0.0
    %496 = vmatmul.mubr.f32.gmra.mrb[0].mxu0 %v402
    %v497 = vpop.f32.mrb[0].mxu0
    %v498 = vadd.f32 %v383, %v497
    %v499 = vpop.f32.mrb[0].mxu0
    %v500 = vadd.f32 %v387, %v499
    %501 = vmatprep.mubr.f32.mxu0 0.0
    %502 = vmatmul.mubr.f32.gmra.mrb[0].mxu0 %v405
    %v503 = vpop.f32.mrb[0].mxu0
    %v504 = vadd.f32 %v383, %v503
    %v505 = vpop.f32.mrb[0].mxu0
    %v506 = vadd.f32 %v387, %v505
    %507 = vmatprep.mubr.f32.mxu0 0.0
    %508 = vmatmul.mubr.f32.gmra.mrb[0].mxu0 %v408
    %v509 = vpop.f32.mrb[0].mxu0
    %v510 = vadd.f32 %v383, %v509
    %v511 = vpop.f32.mrb[0].mxu0
    %v512 = vadd.f32 %v387, %v511
    %513 = vmatprep.mubr.f32.mxu0 0.0
    %514 = vmatmul.mubr.f32.gmra.mrb[0].mxu0 %v411
    %v515 = vpop.f32.mrb[0].mxu0
    %v516 = vadd.f32 %v383, %v515
    %v517 = vpop.f32.mrb[0].mxu0
    %v518 = vadd.f32 %v387, %v517
    %519 = vmatprep.mubr.f32.mxu0 0.0
    %520 = vmatmul.mubr.f32.gmra.mrb[0].mxu0 %v414
    %v521 = vpop.f32.mrb[0].mxu0
    %v522 = vadd.f32 %v383, %v521
    %v523 = vpop.f32.mrb[0].mxu0
    %v524 = vadd.f32 %v387, %v523
    %525 = vmatprep.mubr.f32.mxu0 0.0
    %526 = vmatmul.mubr.f32.gmra.mrb[0].mxu0 %v417
    %v527 = vpop.f32.mrb[0].mxu0
    %v528 = vadd.f32 %v383, %v527
    %v529 = vpop.f32.mrb[0].mxu0
    %v530 = vadd.f32 %v387, %v529
    %531 = vdwg.mxu0
    %532 = vmatprep.subr.mxu0 0.0
    %533 = vmatpush1.msra.mxu0 %v368
    %534 = vmatprep.subr.mxu0 0.0
    %535 = vmatpush1.msra.mxu0 %v371
    %536 = vmatprep.subr.mxu0 0.0
    %537 = vmatpush1.msra.mxu0 %v374
    %538 = vmatprep.subr.mxu0 0.0
    %539 = vmatpush1.msra.mxu0 %v377
    %540 = vmatprep.subr.mxu0 0.0
    %541 = vmatpush1.msra.mxu0 0.0
    %542 = vmatprep.subr.mxu0 0.0
    %543 = vmatpush1.msra.mxu0 0.0
    %544 = vmatprep.subr.mxu0 0.0
    %545 = vmatpush1.msra.mxu0 0.0
    %546 = vmatprep.subr.mxu0 0.0
    %547 = vmatpush1.msra.mxu0 0.0
    %548 = vmatprep.subr.mxu0 0.0
    %549 = vmatpush1.msra.mxu0 0.0
    %550 = vmatprep.subr.mxu0 0.0
    %551 = vmatpush1.msra.mxu0 0.0
    %552 = vmatprep.subr.mxu0 0.0
    %553 = vmatpush1.msra.mxu0 0.0
    %554 = vmatprep.subr.mxu0 0.0
    %555 = vmatpush1.msra.mxu0 0.0
    %556 = vmatprep.subr.mxu0 0.0
    %557 = vmatpush1.msra.mxu0 0.0
    %558 = vmatprep.subr.mxu0 0.0
    %559 = vmatpush1.msra.mxu0 0.0
    %560 = vmatprep.subr.mxu0 0.0
    %561 = vmatpush1.msra.mxu0 0.0
    %562 = vmatprep.subr.mxu0 0.0
    %563 = vmatpush1.msra.mxu0 0.0
    %564 = vmatprep.subr.mxu0 0.0
    %565 = vmatpush1.msra.mxu0 0.0
    %566 = vmatprep.subr.mxu0 0.0
    %567 = vmatpush1.msra.mxu0 0.0
    %568 = vmatprep.subr.mxu0 0.0
    %569 = vmatpush1.msra.mxu0 0.0
    %570 = vmatprep.subr.mxu0 0.0
    %571 = vmatpush1.msra.mxu0 0.0
    %572 = vmatprep.subr.mxu0 0.0
    %573 = vmatpush1.msra.mxu0 0.0
    %574 = vmatprep.subr.mxu0 0.0
    %575 = vmatpush1.msra.mxu0 0.0
    %576 = vmatprep.subr.mxu0 0.0
    %577 = vmatpush1.msra.mxu0 0.0
    %578 = vmatprep.subr.mxu0 0.0
    %579 = vmatpush1.msra.mxu0 0.0
    %580 = vmatprep.subr.mxu0 0.0
    %581 = vmatpush1.msra.mxu0 0.0
    %582 = vmatprep.subr.mxu0 0.0
    %583 = vmatpush1.msra.mxu0 0.0
    %584 = vmatprep.subr.mxu0 0.0
    %585 = vmatpush1.msra.mxu0 0.0
    %586 = vmatprep.subr.mxu0 0.0
    %587 = vmatpush1.msra.mxu0 0.0
    %588 = vmatprep.subr.mxu0 0.0
    %589 = vmatpush1.msra.mxu0 0.0
    %590 = vmatprep.subr.mxu0 0.0
    %591 = vmatpush1.msra.mxu0 0.0
    %592 = vmatprep.subr.mxu0 0.0
    %593 = vmatpush1.msra.mxu0 0.0
    %594 = vmatprep.subr.mxu0 0.0
    %595 = vmatpush1.msra.mxu0 0.0
    %596 = vmatprep.mubr.f32.mxu0 0.0
    %597 = vmatmul.mubr.f32.gmra.mrb[0].mxu0 %v396
    %v598 = vpop.f32.mrb[0].mxu0
    %v599 = vadd.f32 %v391, %v598
    %v600 = vpop.f32.mrb[0].mxu0
    %601 = vmatprep.mubr.f32.mxu0 0.0
    %602 = vmatmul.mubr.f32.gmra.mrb[0].mxu0 %v399
    %v603 = vpop.f32.mrb[0].mxu0
    %v604 = vadd.f32 %v391, %v603
    %v605 = vpop.f32.mrb[0].mxu0
    %606 = vmatprep.mubr.f32.mxu0 0.0
    %607 = vmatmul.mubr.f32.gmra.mrb[0].mxu0 %v402
    %v608 = vpop.f32.mrb[0].mxu0
    %v609 = vadd.f32 %v391, %v608
    %v610 = vpop.f32.mrb[0].mxu0
    %611 = vmatprep.mubr.f32.mxu0 0.0
    %612 = vmatmul.mubr.f32.gmra.mrb[0].mxu0 %v405
    %v613 = vpop.f32.mrb[0].mxu0
    %v614 = vadd.f32 %v391, %v613
    %v615 = vpop.f32.mrb[0].mxu0
    %616 = vmatprep.mubr.f32.mxu0 0.0
    %617 = vmatmul.mubr.f32.gmra.mrb[0].mxu0 %v408
    %v618 = vpop.f32.mrb[0].mxu0
    %v619 = vadd.f32 %v391, %v618
    %v620 = vpop.f32.mrb[0].mxu0
    %621 = vmatprep.mubr.f32.mxu0 0.0
    %622 = vmatmul.mubr.f32.gmra.mrb[0].mxu0 %v411
    %v623 = vpop.f32.mrb[0].mxu0
    %v624 = vadd.f32 %v391, %v623
    %v625 = vpop.f32.mrb[0].mxu0
    %626 = vmatprep.mubr.f32.mxu0 0.0
    %627 = vmatmul.mubr.f32.gmra.mrb[0].mxu0 %v414
    %v628 = vpop.f32.mrb[0].mxu0
    %v629 = vadd.f32 %v391, %v628
    %v630 = vpop.f32.mrb[0].mxu0
    %631 = vmatprep.mubr.f32.mxu0 0.0
    %632 = vmatmul.mubr.f32.gmra.mrb[0].mxu0 %v417
    %v633 = vpop.f32.mrb[0].mxu0
    %v634 = vadd.f32 %v391, %v633
    %v635 = vpop.f32.mrb[0].mxu0
    %636 = vdwg.mxu0
    %v637 = vld [vmem:[#allocation3] sm:$0xff]
    %v638 = vld [vmem:[#allocation3 + $0x8] sm:$0xff]
    %v639 = vld [vmem:[#allocation3 + $0x10] sm:$0xff]
    %v640 = vld [vmem:[#allocation3 + $0x18] sm:$0xff]
    %v641 = vld [vmem:[#allocation3 + $0x20] sm:$0xff]
    %v642 = vld [vmem:[#allocation3 + $0x28] sm:$0xff]
    %v643 = vld [vmem:[#allocation3 + $0x30] sm:$0xff]
    %v644 = vld [vmem:[#allocation3 + $0x38] sm:$0xff]
    %v645 = vld [vmem:[#allocation3 + $0x40] sm:$0xff]
    %v646 = vld [vmem:[#allocation3 + $0x48] sm:$0xff]
    %v647 = vld [vmem:[#allocation3 + $0x50] sm:$0xff]
    %v648 = vld [vmem:[#allocation3 + $0x58] sm:$0xff]
    %v649 = vld [vmem:[#allocation3 + $0x60] sm:$0xff]
    %v650 = vld [vmem:[#allocation3 + $0x68] sm:$0xff]
    %v651 = vld [vmem:[#allocation3 + $0x70] sm:$0xff]
    %v652 = vld [vmem:[#allocation3 + $0x78] sm:$0xff]
    %v653 = vld [vmem:[#allocation3 + $0x80] sm:$0xff]
    %v654 = vld [vmem:[#allocation3 + $0x88] sm:$0xff]
    %v655 = vld [vmem:[#allocation3 + $0x90] sm:$0xff]
    %v656 = vld [vmem:[#allocation3 + $0x98] sm:$0xff]
    %v657 = vld [vmem:[#allocation3 + $0xa0] sm:$0xff]
    %v658 = vld [vmem:[#allocation3 + $0xa8] sm:$0xff]
    %v659 = vld [vmem:[#allocation3 + $0xb0] sm:$0xff]
    %v660 = vld [vmem:[#allocation3 + $0xb8] sm:$0xff]
    %v661 = vld [vmem:[#allocation3 + $0xc0] sm:$0xff]
    %v662 = vld [vmem:[#allocation3 + $0xc8] sm:$0xff]
    %v663 = vld [vmem:[#allocation3 + $0xd0] sm:$0xff]
    %v664 = vld [vmem:[#allocation3 + $0xd8] sm:$0xff]
    %v665 = vld [vmem:[#allocation3 + $0xe0] sm:$0xff]
    %v666 = vld [vmem:[#allocation3 + $0xe8] sm:$0xff]
    %v667 = vld [vmem:[#allocation3 + $0xf0] sm:$0xff]
    %v668 = vld [vmem:[#allocation3 + $0xf8] sm:$0xff]
    %v669 = vld [vmem:[#allocation3 + $0x100] sm:$0xff]
    %v670 = vld [vmem:[#allocation3 + $0x108] sm:$0xff]
    %v671 = vld [vmem:[#allocation3 + $0x110] sm:$0xff]
    %v672 = vld [vmem:[#allocation3 + $0x118] sm:$0xff]
    %v673 = vld [vmem:[#allocation3 + $0x120] sm:$0xff]
    %v674 = vld [vmem:[#allocation3 + $0x128] sm:$0xff]
    %v675 = vld [vmem:[#allocation3 + $0x130] sm:$0xff]
    %v676 = vld [vmem:[#allocation3 + $0x138] sm:$0xff]
    %v677 = vld [vmem:[#allocation3 + $0x140] sm:$0xff]
    %v678 = vld [vmem:[#allocation3 + $0x148] sm:$0xff]
    %v679 = vld [vmem:[#allocation3 + $0x150] sm:$0xff]
    %v680 = vld [vmem:[#allocation3 + $0x158] sm:$0xff]
    %v681 = vld [vmem:[#allocation3 + $0x160] sm:$0xff]
    %v682 = vld [vmem:[#allocation3 + $0x168] sm:$0xff]
    %v683 = vld [vmem:[#allocation3 + $0x170] sm:$0xff]
    %v684 = vld [vmem:[#allocation3 + $0x178] sm:$0xff]
    %v685 = vld [vmem:[%s8] sm:$0x7]
    %v687 = vlaneseq
    %v688 = vshrl.u32 %v687, 7
    %v689 = vsub.s32 0, %v688
    %v690 = vrot.slane %v685, %v689
    %v691 = vlaneseq
    %v692 = vshrl.u32 %v691, 7
    %v693 = vsub.s32 1, %v692
    %v694 = vrot.slane %v685, %v693
    %v695 = vlaneseq
    %v696 = vshrl.u32 %v695, 7
    %v697 = vsub.s32 2, %v696
    %v698 = vrot.slane %v685, %v697
    %702 = vmatprep.subr.mxu0 %v638
    %703 = vmatpush1.msra.mxu0 %v637
    %704 = vmatprep.subr.mxu0 %v641
    %705 = vmatpush1.msra.mxu0 %v640
    %706 = vmatprep.subr.mxu0 %v644
    %707 = vmatpush1.msra.mxu0 %v643
    %708 = vmatprep.subr.mxu0 %v647
    %709 = vmatpush1.msra.mxu0 %v646
    %710 = vmatprep.subr.mxu0 %v650
    %711 = vmatpush1.msra.mxu0 %v649
    %712 = vmatprep.subr.mxu0 %v653
    %713 = vmatpush1.msra.mxu0 %v652
    %714 = vmatprep.subr.mxu0 %v656
    %715 = vmatpush1.msra.mxu0 %v655
    %716 = vmatprep.subr.mxu0 %v659
    %717 = vmatpush1.msra.mxu0 %v658
    %718 = vmatprep.subr.mxu0 %v662
    %719 = vmatpush1.msra.mxu0 %v661
    %720 = vmatprep.subr.mxu0 %v665
    %721 = vmatpush1.msra.mxu0 %v664
    %722 = vmatprep.subr.mxu0 %v668
    %723 = vmatpush1.msra.mxu0 %v667
    %724 = vmatprep.subr.mxu0 %v671
    %725 = vmatpush1.msra.mxu0 %v670
    %726 = vmatprep.subr.mxu0 %v674
    %727 = vmatpush1.msra.mxu0 %v673
    %728 = vmatprep.subr.mxu0 %v677
    %729 = vmatpush1.msra.mxu0 %v676
    %730 = vmatprep.subr.mxu0 %v680
    %731 = vmatpush1.msra.mxu0 %v679
    %732 = vmatprep.subr.mxu0 %v683
    %733 = vmatpush1.msra.mxu0 %v682
    %734 = vmatprep.subr.mxu0 0.0
    %735 = vmatpush1.msra.mxu0 0.0
    %736 = vmatprep.subr.mxu0 0.0
    %737 = vmatpush1.msra.mxu0 0.0
    %738 = vmatprep.subr.mxu0 0.0
    %739 = vmatpush1.msra.mxu0 0.0
    %740 = vmatprep.subr.mxu0 0.0
    %741 = vmatpush1.msra.mxu0 0.0
    %742 = vmatprep.subr.mxu0 0.0
    %743 = vmatpush1.msra.mxu0 0.0
    %744 = vmatprep.subr.mxu0 0.0
    %745 = vmatpush1.msra.mxu0 0.0
    %746 = vmatprep.subr.mxu0 0.0
    %747 = vmatpush1.msra.mxu0 0.0
    %748 = vmatprep.subr.mxu0 0.0
    %749 = vmatpush1.msra.mxu0 0.0
    %750 = vmatprep.subr.mxu0 0.0
    %751 = vmatpush1.msra.mxu0 0.0
    %752 = vmatprep.subr.mxu0 0.0
    %753 = vmatpush1.msra.mxu0 0.0
    %754 = vmatprep.subr.mxu0 0.0
    %755 = vmatpush1.msra.mxu0 0.0
    %756 = vmatprep.subr.mxu0 0.0
    %757 = vmatpush1.msra.mxu0 0.0
    %758 = vmatprep.subr.mxu0 0.0
    %759 = vmatpush1.msra.mxu0 0.0
    %760 = vmatprep.subr.mxu0 0.0
    %761 = vmatpush1.msra.mxu0 0.0
    %762 = vmatprep.subr.mxu0 0.0
    %763 = vmatpush1.msra.mxu0 0.0
    %764 = vmatprep.subr.mxu0 0.0
    %765 = vmatpush1.msra.mxu0 0.0
    %766 = vmatprep.mubr.f32.mxu0 0.0
    %767 = vmatmul.mubr.f32.gmra.mrb[0].mxu0 0.0
    %v768 = vpop.f32.mrb[0].mxu0
    %v769 = vadd.f32 %v690, %v768
    %v770 = vpop.f32.mrb[0].mxu0
    %v771 = vadd.f32 %v694, %v770
    %772 = vdwg.mxu0
    %773 = vmatprep.subr.mxu0 0.0
    %774 = vmatpush1.msra.mxu0 %v639
    %775 = vmatprep.subr.mxu0 0.0
    %776 = vmatpush1.msra.mxu0 %v642
    %777 = vmatprep.subr.mxu0 0.0
    %778 = vmatpush1.msra.mxu0 %v645
    %779 = vmatprep.subr.mxu0 0.0
    %780 = vmatpush1.msra.mxu0 %v648
    %781 = vmatprep.subr.mxu0 0.0
    %782 = vmatpush1.msra.mxu0 %v651
    %783 = vmatprep.subr.mxu0 0.0
    %784 = vmatpush1.msra.mxu0 %v654
    %785 = vmatprep.subr.mxu0 0.0
    %786 = vmatpush1.msra.mxu0 %v657
    %787 = vmatprep.subr.mxu0 0.0
    %788 = vmatpush1.msra.mxu0 %v660
    %789 = vmatprep.subr.mxu0 0.0
    %790 = vmatpush1.msra.mxu0 %v663
    %791 = vmatprep.subr.mxu0 0.0
    %792 = vmatpush1.msra.mxu0 %v666
    %793 = vmatprep.subr.mxu0 0.0
    %794 = vmatpush1.msra.mxu0 %v669
    %795 = vmatprep.subr.mxu0 0.0
    %796 = vmatpush1.msra.mxu0 %v672
    %797 = vmatprep.subr.mxu0 0.0
    %798 = vmatpush1.msra.mxu0 %v675
    %799 = vmatprep.subr.mxu0 0.0
    %800 = vmatpush1.msra.mxu0 %v678
    %801 = vmatprep.subr.mxu0 0.0
    %802 = vmatpush1.msra.mxu0 %v681
    %803 = vmatprep.subr.mxu0 0.0
    %804 = vmatpush1.msra.mxu0 %v684
    %805 = vmatprep.subr.mxu0 0.0
    %806 = vmatpush1.msra.mxu0 0.0
    %807 = vmatprep.subr.mxu0 0.0
    %808 = vmatpush1.msra.mxu0 0.0
    %809 = vmatprep.subr.mxu0 0.0
    %810 = vmatpush1.msra.mxu0 0.0
    %811 = vmatprep.subr.mxu0 0.0
    %812 = vmatpush1.msra.mxu0 0.0
    %813 = vmatprep.subr.mxu0 0.0
    %814 = vmatpush1.msra.mxu0 0.0
    %815 = vmatprep.subr.mxu0 0.0
    %816 = vmatpush1.msra.mxu0 0.0
    %817 = vmatprep.subr.mxu0 0.0
    %818 = vmatpush1.msra.mxu0 0.0
    %819 = vmatprep.subr.mxu0 0.0
    %820 = vmatpush1.msra.mxu0 0.0
    %821 = vmatprep.subr.mxu0 0.0
    %822 = vmatpush1.msra.mxu0 0.0
    %823 = vmatprep.subr.mxu0 0.0
    %824 = vmatpush1.msra.mxu0 0.0
    %825 = vmatprep.subr.mxu0 0.0
    %826 = vmatpush1.msra.mxu0 0.0
    %827 = vmatprep.subr.mxu0 0.0
    %828 = vmatpush1.msra.mxu0 0.0
    %829 = vmatprep.subr.mxu0 0.0
    %830 = vmatpush1.msra.mxu0 0.0
    %831 = vmatprep.subr.mxu0 0.0
    %832 = vmatpush1.msra.mxu0 0.0
    %833 = vmatprep.subr.mxu0 0.0
    %834 = vmatpush1.msra.mxu0 0.0
    %835 = vmatprep.subr.mxu0 0.0
    %836 = vmatpush1.msra.mxu0 0.0
    %837 = vmatprep.mubr.f32.mxu0 0.0
    %838 = vmatmul.mubr.f32.gmra.mrb[0].mxu0 0.0
    %v839 = vpop.f32.mrb[0].mxu0
    %v840 = vadd.f32 %v698, %v839
    %v841 = vpop.f32.mrb[0].mxu0
    %842 = vdwg.mxu0
    %v843 = vadd.f32 %v486, %v769
    %v844 = vadd.f32 %v488, %v771
    %v845 = vxor.u32 %v843, 2147483648
    %v846 = vxor.u32 %v844, 2147483648
    %v847 = vmul.f32 %v845, 1.442695
    %v848 = vpow.pop %v847
    %v849 = vmul.f32 %v846, 1.442695
    %v850 = vpow.pop %v849
    %v851 = vadd.f32 %v848, 1.0
    %v852 = vadd.f32 %v850, 1.0
    %v853 = vrcp.pop %v851
    %v854 = vmul.f32 1.0, %v853
    %v855 = vrcp.pop %v852
    %v856 = vmul.f32 1.0, %v855
    %v857 = vmul.f32 %v854, %v840
    %v858 = vadd.f32 %v599, %v857
    %v859 = vtanh.pop %v858
    %v860 = vsub.f32 1.0, %v856
    %v861 = vmul.f32 %v860, %v859
    %v862 = vmul.f32 %v856, 0.0
    %v863 = vadd.f32 %v861, %v862
    %864 = vst [vmem:[#allocation2] sm:$0xff] %v863
    %865 = vmatprep.subr.mxu0 %v638
    %866 = vmatpush1.msra.mxu0 %v637
    %867 = vmatprep.subr.mxu0 %v641
    %868 = vmatpush1.msra.mxu0 %v640
    %869 = vmatprep.subr.mxu0 %v644
    %870 = vmatpush1.msra.mxu0 %v643
    %871 = vmatprep.subr.mxu0 %v647
    %872 = vmatpush1.msra.mxu0 %v646
    %873 = vmatprep.subr.mxu0 %v650
    %874 = vmatpush1.msra.mxu0 %v649
    %875 = vmatprep.subr.mxu0 %v653
    %876 = vmatpush1.msra.mxu0 %v652
    %877 = vmatprep.subr.mxu0 %v656
    %878 = vmatpush1.msra.mxu0 %v655
    %879 = vmatprep.subr.mxu0 %v659
    %880 = vmatpush1.msra.mxu0 %v658
    %881 = vmatprep.subr.mxu0 %v662
    %882 = vmatpush1.msra.mxu0 %v661
    %883 = vmatprep.subr.mxu0 %v665
    %884 = vmatpush1.msra.mxu0 %v664
    %885 = vmatprep.subr.mxu0 %v668
    %886 = vmatpush1.msra.mxu0 %v667
    %887 = vmatprep.subr.mxu0 %v671
    %888 = vmatpush1.msra.mxu0 %v670
    %889 = vmatprep.subr.mxu0 %v674
    %890 = vmatpush1.msra.mxu0 %v673
    %891 = vmatprep.subr.mxu0 %v677
    %892 = vmatpush1.msra.mxu0 %v676
    %893 = vmatprep.subr.mxu0 %v680
    %894 = vmatpush1.msra.mxu0 %v679
    %895 = vmatprep.subr.mxu0 %v683
    %896 = vmatpush1.msra.mxu0 %v682
    %897 = vmatprep.subr.mxu0 0.0
    %898 = vmatpush1.msra.mxu0 0.0
    %899 = vmatprep.subr.mxu0 0.0
    %900 = vmatpush1.msra.mxu0 0.0
    %901 = vmatprep.subr.mxu0 0.0
    %902 = vmatpush1.msra.mxu0 0.0
    %903 = vmatprep.subr.mxu0 0.0
    %904 = vmatpush1.msra.mxu0 0.0
    %905 = vmatprep.subr.mxu0 0.0
    %906 = vmatpush1.msra.mxu0 0.0
    %907 = vmatprep.subr.mxu0 0.0
    %908 = vmatpush1.msra.mxu0 0.0
    %909 = vmatprep.subr.mxu0 0.0
    %910 = vmatpush1.msra.mxu0 0.0
    %911 = vmatprep.subr.mxu0 0.0
    %912 = vmatpush1.msra.mxu0 0.0
    %913 = vmatprep.subr.mxu0 0.0
    %914 = vmatpush1.msra.mxu0 0.0
    %915 = vmatprep.subr.mxu0 0.0
    %916 = vmatpush1.msra.mxu0 0.0
    %917 = vmatprep.subr.mxu0 0.0
    %918 = vmatpush1.msra.mxu0 0.0
    %919 = vmatprep.subr.mxu0 0.0
    %920 = vmatpush1.msra.mxu0 0.0
    %921 = vmatprep.subr.mxu0 0.0
    %922 = vmatpush1.msra.mxu0 0.0
    %923 = vmatprep.subr.mxu0 0.0
    %924 = vmatpush1.msra.mxu0 0.0
    %925 = vmatprep.subr.mxu0 0.0
    %926 = vmatpush1.msra.mxu0 0.0
    %927 = vmatprep.subr.mxu0 0.0
    %928 = vmatpush1.msra.mxu0 0.0
    %929 = vmatprep.mubr.f32.mxu0 0.0
    %930 = vmatmul.mubr.f32.gmra.mrb[0].mxu0 %v863
    %v931 = vpop.f32.mrb[0].mxu0
    %v932 = vadd.f32 %v690, %v931
    %v933 = vpop.f32.mrb[0].mxu0
    %v934 = vadd.f32 %v694, %v933
    %935 = vdwg.mxu0
    %936 = vmatprep.subr.mxu0 0.0
    %937 = vmatpush1.msra.mxu0 %v639
    %938 = vmatprep.subr.mxu0 0.0
    %939 = vmatpush1.msra.mxu0 %v642
    %940 = vmatprep.subr.mxu0 0.0
    %941 = vmatpush1.msra.mxu0 %v645
    %942 = vmatprep.subr.mxu0 0.0
    %943 = vmatpush1.msra.mxu0 %v648
    %944 = vmatprep.subr.mxu0 0.0
    %945 = vmatpush1.msra.mxu0 %v651
    %946 = vmatprep.subr.mxu0 0.0
    %947 = vmatpush1.msra.mxu0 %v654
    %948 = vmatprep.subr.mxu0 0.0
    %949 = vmatpush1.msra.mxu0 %v657
    %950 = vmatprep.subr.mxu0 0.0
    %951 = vmatpush1.msra.mxu0 %v660
    %952 = vmatprep.subr.mxu0 0.0
    %953 = vmatpush1.msra.mxu0 %v663
    %954 = vmatprep.subr.mxu0 0.0
    %955 = vmatpush1.msra.mxu0 %v666
    %956 = vmatprep.subr.mxu0 0.0
    %957 = vmatpush1.msra.mxu0 %v669
    %958 = vmatprep.subr.mxu0 0.0
    %959 = vmatpush1.msra.mxu0 %v672
    %960 = vmatprep.subr.mxu0 0.0
    %961 = vmatpush1.msra.mxu0 %v675
    %962 = vmatprep.subr.mxu0 0.0
    %963 = vmatpush1.msra.mxu0 %v678
    %964 = vmatprep.subr.mxu0 0.0
    %965 = vmatpush1.msra.mxu0 %v681
    %966 = vmatprep.subr.mxu0 0.0
    %967 = vmatpush1.msra.mxu0 %v684
    %968 = vmatprep.subr.mxu0 0.0
    %969 = vmatpush1.msra.mxu0 0.0
    %970 = vmatprep.subr.mxu0 0.0
    %971 = vmatpush1.msra.mxu0 0.0
    %972 = vmatprep.subr.mxu0 0.0
    %973 = vmatpush1.msra.mxu0 0.0
    %974 = vmatprep.subr.mxu0 0.0
    %975 = vmatpush1.msra.mxu0 0.0
    %976 = vmatprep.subr.mxu0 0.0
    %977 = vmatpush1.msra.mxu0 0.0
    %978 = vmatprep.subr.mxu0 0.0
    %979 = vmatpush1.msra.mxu0 0.0
    %980 = vmatprep.subr.mxu0 0.0
    %981 = vmatpush1.msra.mxu0 0.0
    %982 = vmatprep.subr.mxu0 0.0
    %983 = vmatpush1.msra.mxu0 0.0
    %984 = vmatprep.subr.mxu0 0.0
    %985 = vmatpush1.msra.mxu0 0.0
    %986 = vmatprep.subr.mxu0 0.0
    %987 = vmatpush1.msra.mxu0 0.0
    %988 = vmatprep.subr.mxu0 0.0
    %989 = vmatpush1.msra.mxu0 0.0
    %990 = vmatprep.subr.mxu0 0.0
    %991 = vmatpush1.msra.mxu0 0.0
    %992 = vmatprep.subr.mxu0 0.0
    %993 = vmatpush1.msra.mxu0 0.0
    %994 = vmatprep.subr.mxu0 0.0
    %995 = vmatpush1.msra.mxu0 0.0
    %996 = vmatprep.subr.mxu0 0.0
    %997 = vmatpush1.msra.mxu0 0.0
    %998 = vmatprep.subr.mxu0 0.0
    %999 = vmatpush1.msra.mxu0 0.0
    %1000 = vmatprep.mubr.f32.mxu0 0.0
    %1001 = vmatmul.mubr.f32.gmra.mrb[0].mxu0 %v863
    %v1002 = vpop.f32.mrb[0].mxu0
    %v1003 = vadd.f32 %v698, %v1002
    %v1004 = vpop.f32.mrb[0].mxu0
    %1005 = vdwg.mxu0
    %v1006 = vadd.f32 %v492, %v932
    %v1007 = vadd.f32 %v494, %v934
    %v1008 = vxor.u32 %v1006, 2147483648
    %v1009 = vxor.u32 %v1007, 2147483648
    %v1010 = vmul.f32 %v1008, 1.442695
    %v1011 = vpow.pop %v1010
    %v1012 = vmul.f32 %v1009, 1.442695
    %v1013 = vpow.pop %v1012
    %v1014 = vadd.f32 %v1011, 1.0
    %v1015 = vadd.f32 %v1013, 1.0
    %v1016 = vrcp.pop %v1014
    %v1017 = vmul.f32 1.0, %v1016
    %v1018 = vrcp.pop %v1015
    %v1019 = vmul.f32 1.0, %v1018
    %v1020 = vmul.f32 %v1017, %v1003
    %v1021 = vadd.f32 %v604, %v1020
    %v1022 = vtanh.pop %v1021
    %v1023 = vsub.f32 1.0, %v1019
    %v1024 = vmul.f32 %v1023, %v1022
    %v1025 = vmul.f32 %v1019, %v863
    %v1026 = vadd.f32 %v1024, %v1025
    %1027 = vst [vmem:[#allocation2 + $0x8] sm:$0xff] %v1026
    %1028 = vmatprep.subr.mxu0 %v638
    %1029 = vmatpush1.msra.mxu0 %v637
    %1030 = vmatprep.subr.mxu0 %v641
    %1031 = vmatpush1.msra.mxu0 %v640
    %1032 = vmatprep.subr.mxu0 %v644
    %1033 = vmatpush1.msra.mxu0 %v643
    %1034 = vmatprep.subr.mxu0 %v647
    %1035 = vmatpush1.msra.mxu0 %v646
    %1036 = vmatprep.subr.mxu0 %v650
    %1037 = vmatpush1.msra.mxu0 %v649
    %1038 = vmatprep.subr.mxu0 %v653
    %1039 = vmatpush1.msra.mxu0 %v652
    %1040 = vmatprep.subr.mxu0 %v656
    %1041 = vmatpush1.msra.mxu0 %v655
    %1042 = vmatprep.subr.mxu0 %v659
    %1043 = vmatpush1.msra.mxu0 %v658
    %1044 = vmatprep.subr.mxu0 %v662
    %1045 = vmatpush1.msra.mxu0 %v661
    %1046 = vmatprep.subr.mxu0 %v665
    %1047 = vmatpush1.msra.mxu0 %v664
    %1048 = vmatprep.subr.mxu0 %v668
    %1049 = vmatpush1.msra.mxu0 %v667
    %1050 = vmatprep.subr.mxu0 %v671
    %1051 = vmatpush1.msra.mxu0 %v670
    %1052 = vmatprep.subr.mxu0 %v674
    %1053 = vmatpush1.msra.mxu0 %v673
    %1054 = vmatprep.subr.mxu0 %v677
    %1055 = vmatpush1.msra.mxu0 %v676
    %1056 = vmatprep.subr.mxu0 %v680
    %1057 = vmatpush1.msra.mxu0 %v679
    %1058 = vmatprep.subr.mxu0 %v683
    %1059 = vmatpush1.msra.mxu0 %v682
    %1060 = vmatprep.subr.mxu0 0.0
    %1061 = vmatpush1.msra.mxu0 0.0
    %1062 = vmatprep.subr.mxu0 0.0
    %1063 = vmatpush1.msra.mxu0 0.0
    %1064 = vmatprep.subr.mxu0 0.0
    %1065 = vmatpush1.msra.mxu0 0.0
    %1066 = vmatprep.subr.mxu0 0.0
    %1067 = vmatpush1.msra.mxu0 0.0
    %1068 = vmatprep.subr.mxu0 0.0
    %1069 = vmatpush1.msra.mxu0 0.0
    %1070 = vmatprep.subr.mxu0 0.0
    %1071 = vmatpush1.msra.mxu0 0.0
    %1072 = vmatprep.subr.mxu0 0.0
    %1073 = vmatpush1.msra.mxu0 0.0
    %1074 = vmatprep.subr.mxu0 0.0
    %1075 = vmatpush1.msra.mxu0 0.0
    %1076 = vmatprep.subr.mxu0 0.0
    %1077 = vmatpush1.msra.mxu0 0.0
    %1078 = vmatprep.subr.mxu0 0.0
    %1079 = vmatpush1.msra.mxu0 0.0
    %1080 = vmatprep.subr.mxu0 0.0
    %1081 = vmatpush1.msra.mxu0 0.0
    %1082 = vmatprep.subr.mxu0 0.0
    %1083 = vmatpush1.msra.mxu0 0.0
    %1084 = vmatprep.subr.mxu0 0.0
    %1085 = vmatpush1.msra.mxu0 0.0
    %1086 = vmatprep.subr.mxu0 0.0
    %1087 = vmatpush1.msra.mxu0 0.0
    %1088 = vmatprep.subr.mxu0 0.0
    %1089 = vmatpush1.msra.mxu0 0.0
    %1090 = vmatprep.subr.mxu0 0.0
    %1091 = vmatpush1.msra.mxu0 0.0
    %1092 = vmatprep.mubr.f32.mxu0 0.0
    %1093 = vmatmul.mubr.f32.gmra.mrb[0].mxu0 %v1026
    %v1094 = vpop.f32.mrb[0].mxu0
    %v1095 = vadd.f32 %v690, %v1094
    %v1096 = vpop.f32.mrb[0].mxu0
    %v1097 = vadd.f32 %v694, %v1096
    %1098 = vdwg.mxu0
    %1099 = vmatprep.subr.mxu0 0.0
    %1100 = vmatpush1.msra.mxu0 %v639
    %1101 = vmatprep.subr.mxu0 0.0
    %1102 = vmatpush1.msra.mxu0 %v642
    %1103 = vmatprep.subr.mxu0 0.0
    %1104 = vmatpush1.msra.mxu0 %v645
    %1105 = vmatprep.subr.mxu0 0.0
    %1106 = vmatpush1.msra.mxu0 %v648
    %1107 = vmatprep.subr.mxu0 0.0
    %1108 = vmatpush1.msra.mxu0 %v651
    %1109 = vmatprep.subr.mxu0 0.0
    %1110 = vmatpush1.msra.mxu0 %v654
    %1111 = vmatprep.subr.mxu0 0.0
    %1112 = vmatpush1.msra.mxu0 %v657
    %1113 = vmatprep.subr.mxu0 0.0
    %1114 = vmatpush1.msra.mxu0 %v660
    %1115 = vmatprep.subr.mxu0 0.0
    %1116 = vmatpush1.msra.mxu0 %v663
    %1117 = vmatprep.subr.mxu0 0.0
    %1118 = vmatpush1.msra.mxu0 %v666
    %1119 = vmatprep.subr.mxu0 0.0
    %1120 = vmatpush1.msra.mxu0 %v669
    %1121 = vmatprep.subr.mxu0 0.0
    %1122 = vmatpush1.msra.mxu0 %v672
    %1123 = vmatprep.subr.mxu0 0.0
    %1124 = vmatpush1.msra.mxu0 %v675
    %1125 = vmatprep.subr.mxu0 0.0
    %1126 = vmatpush1.msra.mxu0 %v678
    %1127 = vmatprep.subr.mxu0 0.0
    %1128 = vmatpush1.msra.mxu0 %v681
    %1129 = vmatprep.subr.mxu0 0.0
    %1130 = vmatpush1.msra.mxu0 %v684
    %1131 = vmatprep.subr.mxu0 0.0
    %1132 = vmatpush1.msra.mxu0 0.0
    %1133 = vmatprep.subr.mxu0 0.0
    %1134 = vmatpush1.msra.mxu0 0.0
    %1135 = vmatprep.subr.mxu0 0.0
    %1136 = vmatpush1.msra.mxu0 0.0
    %1137 = vmatprep.subr.mxu0 0.0
    %1138 = vmatpush1.msra.mxu0 0.0
    %1139 = vmatprep.subr.mxu0 0.0
    %1140 = vmatpush1.msra.mxu0 0.0
    %1141 = vmatprep.subr.mxu0 0.0
    %1142 = vmatpush1.msra.mxu0 0.0
    %1143 = vmatprep.subr.mxu0 0.0
    %1144 = vmatpush1.msra.mxu0 0.0
    %1145 = vmatprep.subr.mxu0 0.0
    %1146 = vmatpush1.msra.mxu0 0.0
    %1147 = vmatprep.subr.mxu0 0.0
    %1148 = vmatpush1.msra.mxu0 0.0
    %1149 = vmatprep.subr.mxu0 0.0
    %1150 = vmatpush1.msra.mxu0 0.0
    %1151 = vmatprep.subr.mxu0 0.0
    %1152 = vmatpush1.msra.mxu0 0.0
    %1153 = vmatprep.subr.mxu0 0.0
    %1154 = vmatpush1.msra.mxu0 0.0
    %1155 = vmatprep.subr.mxu0 0.0
    %1156 = vmatpush1.msra.mxu0 0.0
    %1157 = vmatprep.subr.mxu0 0.0
    %1158 = vmatpush1.msra.mxu0 0.0
    %1159 = vmatprep.subr.mxu0 0.0
    %1160 = vmatpush1.msra.mxu0 0.0
    %1161 = vmatprep.subr.mxu0 0.0
    %1162 = vmatpush1.msra.mxu0 0.0
    %1163 = vmatprep.mubr.f32.mxu0 0.0
    %1164 = vmatmul.mubr.f32.gmra.mrb[0].mxu0 %v1026
    %v1165 = vpop.f32.mrb[0].mxu0
    %v1166 = vadd.f32 %v698, %v1165
    %v1167 = vpop.f32.mrb[0].mxu0
    %1168 = vdwg.mxu0
    %v1169 = vadd.f32 %v498, %v1095
    %v1170 = vadd.f32 %v500, %v1097
    %v1171 = vxor.u32 %v1169, 2147483648
    %v1172 = vxor.u32 %v1170, 2147483648
    %v1173 = vmul.f32 %v1171, 1.442695
    %v1174 = vpow.pop %v1173
    %v1175 = vmul.f32 %v1172, 1.442695
    %v1176 = vpow.pop %v1175
    %v1177 = vadd.f32 %v1174, 1.0
    %v1178 = vadd.f32 %v1176, 1.0
    %v1179 = vrcp.pop %v1177
    %v1180 = vmul.f32 1.0, %v1179
    %v1181 = vrcp.pop %v1178
    %v1182 = vmul.f32 1.0, %v1181
    %v1183 = vmul.f32 %v1180, %v1166
    %v1184 = vadd.f32 %v609, %v1183
    %v1185 = vtanh.pop %v1184
    %v1186 = vsub.f32 1.0, %v1182
    %v1187 = vmul.f32 %v1186, %v1185
    %v1188 = vmul.f32 %v1182, %v1026
    %v1189 = vadd.f32 %v1187, %v1188
    %1190 = vst [vmem:[#allocation2 + $0x10] sm:$0xff] %v1189
    %1191 = vmatprep.subr.mxu0 %v638
    %1192 = vmatpush1.msra.mxu0 %v637
    %1193 = vmatprep.subr.mxu0 %v641
    %1194 = vmatpush1.msra.mxu0 %v640
    %1195 = vmatprep.subr.mxu0 %v644
    %1196 = vmatpush1.msra.mxu0 %v643
    %1197 = vmatprep.subr.mxu0 %v647
    %1198 = vmatpush1.msra.mxu0 %v646
    %1199 = vmatprep.subr.mxu0 %v650
    %1200 = vmatpush1.msra.mxu0 %v649
    %1201 = vmatprep.subr.mxu0 %v653
    %1202 = vmatpush1.msra.mxu0 %v652
    %1203 = vmatprep.subr.mxu0 %v656
    %1204 = vmatpush1.msra.mxu0 %v655
    %1205 = vmatprep.subr.mxu0 %v659
    %1206 = vmatpush1.msra.mxu0 %v658
    %1207 = vmatprep.subr.mxu0 %v662
    %1208 = vmatpush1.msra.mxu0 %v661
    %1209 = vmatprep.subr.mxu0 %v665
    %1210 = vmatpush1.msra.mxu0 %v664
    %1211 = vmatprep.subr.mxu0 %v668
    %1212 = vmatpush1.msra.mxu0 %v667
    %1213 = vmatprep.subr.mxu0 %v671
    %1214 = vmatpush1.msra.mxu0 %v670
    %1215 = vmatprep.subr.mxu0 %v674
    %1216 = vmatpush1.msra.mxu0 %v673
    %1217 = vmatprep.subr.mxu0 %v677
    %1218 = vmatpush1.msra.mxu0 %v676
    %1219 = vmatprep.subr.mxu0 %v680
    %1220 = vmatpush1.msra.mxu0 %v679
    %1221 = vmatprep.subr.mxu0 %v683
    %1222 = vmatpush1.msra.mxu0 %v682
    %1223 = vmatprep.subr.mxu0 0.0
    %1224 = vmatpush1.msra.mxu0 0.0
    %1225 = vmatprep.subr.mxu0 0.0
    %1226 = vmatpush1.msra.mxu0 0.0
    %1227 = vmatprep.subr.mxu0 0.0
    %1228 = vmatpush1.msra.mxu0 0.0
    %1229 = vmatprep.subr.mxu0 0.0
    %1230 = vmatpush1.msra.mxu0 0.0
    %1231 = vmatprep.subr.mxu0 0.0
    %1232 = vmatpush1.msra.mxu0 0.0
    %1233 = vmatprep.subr.mxu0 0.0
    %1234 = vmatpush1.msra.mxu0 0.0
    %1235 = vmatprep.subr.mxu0 0.0
    %1236 = vmatpush1.msra.mxu0 0.0
    %1237 = vmatprep.subr.mxu0 0.0
    %1238 = vmatpush1.msra.mxu0 0.0
    %1239 = vmatprep.subr.mxu0 0.0
    %1240 = vmatpush1.msra.mxu0 0.0
    %1241 = vmatprep.subr.mxu0 0.0
    %1242 = vmatpush1.msra.mxu0 0.0
    %1243 = vmatprep.subr.mxu0 0.0
    %1244 = vmatpush1.msra.mxu0 0.0
    %1245 = vmatprep.subr.mxu0 0.0
    %1246 = vmatpush1.msra.mxu0 0.0
    %1247 = vmatprep.subr.mxu0 0.0
    %1248 = vmatpush1.msra.mxu0 0.0
    %1249 = vmatprep.subr.mxu0 0.0
    %1250 = vmatpush1.msra.mxu0 0.0
    %1251 = vmatprep.subr.mxu0 0.0
    %1252 = vmatpush1.msra.mxu0 0.0
    %1253 = vmatprep.subr.mxu0 0.0
    %1254 = vmatpush1.msra.mxu0 0.0
    %1255 = vmatprep.mubr.f32.mxu0 0.0
    %1256 = vmatmul.mubr.f32.gmra.mrb[0].mxu0 %v1189
    %v1257 = vpop.f32.mrb[0].mxu0
    %v1258 = vadd.f32 %v690, %v1257
    %v1259 = vpop.f32.mrb[0].mxu0
    %v1260 = vadd.f32 %v694, %v1259
    %1261 = vdwg.mxu0
    %1262 = vmatprep.subr.mxu0 0.0
    %1263 = vmatpush1.msra.mxu0 %v639
    %1264 = vmatprep.subr.mxu0 0.0
    %1265 = vmatpush1.msra.mxu0 %v642
    %1266 = vmatprep.subr.mxu0 0.0
    %1267 = vmatpush1.msra.mxu0 %v645
    %1268 = vmatprep.subr.mxu0 0.0
    %1269 = vmatpush1.msra.mxu0 %v648
    %1270 = vmatprep.subr.mxu0 0.0
    %1271 = vmatpush1.msra.mxu0 %v651
    %1272 = vmatprep.subr.mxu0 0.0
    %1273 = vmatpush1.msra.mxu0 %v654
    %1274 = vmatprep.subr.mxu0 0.0
    %1275 = vmatpush1.msra.mxu0 %v657
    %1276 = vmatprep.subr.mxu0 0.0
    %1277 = vmatpush1.msra.mxu0 %v660
    %1278 = vmatprep.subr.mxu0 0.0
    %1279 = vmatpush1.msra.mxu0 %v663
    %1280 = vmatprep.subr.mxu0 0.0
    %1281 = vmatpush1.msra.mxu0 %v666
    %1282 = vmatprep.subr.mxu0 0.0
    %1283 = vmatpush1.msra.mxu0 %v669
    %1284 = vmatprep.subr.mxu0 0.0
    %1285 = vmatpush1.msra.mxu0 %v672
    %1286 = vmatprep.subr.mxu0 0.0
    %1287 = vmatpush1.msra.mxu0 %v675
    %1288 = vmatprep.subr.mxu0 0.0
    %1289 = vmatpush1.msra.mxu0 %v678
    %1290 = vmatprep.subr.mxu0 0.0
    %1291 = vmatpush1.msra.mxu0 %v681
    %1292 = vmatprep.subr.mxu0 0.0
    %1293 = vmatpush1.msra.mxu0 %v684
    %1294 = vmatprep.subr.mxu0 0.0
    %1295 = vmatpush1.msra.mxu0 0.0
    %1296 = vmatprep.subr.mxu0 0.0
    %1297 = vmatpush1.msra.mxu0 0.0
    %1298 = vmatprep.subr.mxu0 0.0
    %1299 = vmatpush1.msra.mxu0 0.0
    %1300 = vmatprep.subr.mxu0 0.0
    %1301 = vmatpush1.msra.mxu0 0.0
    %1302 = vmatprep.subr.mxu0 0.0
    %1303 = vmatpush1.msra.mxu0 0.0
    %1304 = vmatprep.subr.mxu0 0.0
    %1305 = vmatpush1.msra.mxu0 0.0
    %1306 = vmatprep.subr.mxu0 0.0
    %1307 = vmatpush1.msra.mxu0 0.0
    %1308 = vmatprep.subr.mxu0 0.0
    %1309 = vmatpush1.msra.mxu0 0.0
    %1310 = vmatprep.subr.mxu0 0.0
    %1311 = vmatpush1.msra.mxu0 0.0
    %1312 = vmatprep.subr.mxu0 0.0
    %1313 = vmatpush1.msra.mxu0 0.0
    %1314 = vmatprep.subr.mxu0 0.0
    %1315 = vmatpush1.msra.mxu0 0.0
    %1316 = vmatprep.subr.mxu0 0.0
    %1317 = vmatpush1.msra.mxu0 0.0
    %1318 = vmatprep.subr.mxu0 0.0
    %1319 = vmatpush1.msra.mxu0 0.0
    %1320 = vmatprep.subr.mxu0 0.0
    %1321 = vmatpush1.msra.mxu0 0.0
    %1322 = vmatprep.subr.mxu0 0.0
    %1323 = vmatpush1.msra.mxu0 0.0
    %1324 = vmatprep.subr.mxu0 0.0
    %1325 = vmatpush1.msra.mxu0 0.0
    %1326 = vmatprep.mubr.f32.mxu0 0.0
    %1327 = vmatmul.mubr.f32.gmra.mrb[0].mxu0 %v1189
    %v1328 = vpop.f32.mrb[0].mxu0
    %v1329 = vadd.f32 %v698, %v1328
    %v1330 = vpop.f32.mrb[0].mxu0
    %1331 = vdwg.mxu0
    %v1332 = vadd.f32 %v504, %v1258
    %v1333 = vadd.f32 %v506, %v1260
    %v1334 = vxor.u32 %v1332, 2147483648
    %v1335 = vxor.u32 %v1333, 2147483648
    %v1336 = vmul.f32 %v1334, 1.442695
    %v1337 = vpow.pop %v1336
    %v1338 = vmul.f32 %v1335, 1.442695
    %v1339 = vpow.pop %v1338
    %v1340 = vadd.f32 %v1337, 1.0
    %v1341 = vadd.f32 %v1339, 1.0
    %v1342 = vrcp.pop %v1340
    %v1343 = vmul.f32 1.0, %v1342
    %v1344 = vrcp.pop %v1341
    %v1345 = vmul.f32 1.0, %v1344
    %v1346 = vmul.f32 %v1343, %v1329
    %v1347 = vadd.f32 %v614, %v1346
    %v1348 = vtanh.pop %v1347
    %v1349 = vsub.f32 1.0, %v1345
    %v1350 = vmul.f32 %v1349, %v1348
    %v1351 = vmul.f32 %v1345, %v1189
    %v1352 = vadd.f32 %v1350, %v1351
    %1353 = vst [vmem:[#allocation2 + $0x18] sm:$0xff] %v1352
    %1354 = vmatprep.subr.mxu0 %v638
    %1355 = vmatpush1.msra.mxu0 %v637
    %1356 = vmatprep.subr.mxu0 %v641
    %1357 = vmatpush1.msra.mxu0 %v640
    %1358 = vmatprep.subr.mxu0 %v644
    %1359 = vmatpush1.msra.mxu0 %v643
    %1360 = vmatprep.subr.mxu0 %v647
    %1361 = vmatpush1.msra.mxu0 %v646
    %1362 = vmatprep.subr.mxu0 %v650
    %1363 = vmatpush1.msra.mxu0 %v649
    %1364 = vmatprep.subr.mxu0 %v653
    %1365 = vmatpush1.msra.mxu0 %v652
    %1366 = vmatprep.subr.mxu0 %v656
    %1367 = vmatpush1.msra.mxu0 %v655
    %1368 = vmatprep.subr.mxu0 %v659
    %1369 = vmatpush1.msra.mxu0 %v658
    %1370 = vmatprep.subr.mxu0 %v662
    %1371 = vmatpush1.msra.mxu0 %v661
    %1372 = vmatprep.subr.mxu0 %v665
    %1373 = vmatpush1.msra.mxu0 %v664
    %1374 = vmatprep.subr.mxu0 %v668
    %1375 = vmatpush1.msra.mxu0 %v667
    %1376 = vmatprep.subr.mxu0 %v671
    %1377 = vmatpush1.msra.mxu0 %v670
    %1378 = vmatprep.subr.mxu0 %v674
    %1379 = vmatpush1.msra.mxu0 %v673
    %1380 = vmatprep.subr.mxu0 %v677
    %1381 = vmatpush1.msra.mxu0 %v676
    %1382 = vmatprep.subr.mxu0 %v680
    %1383 = vmatpush1.msra.mxu0 %v679
    %1384 = vmatprep.subr.mxu0 %v683
    %1385 = vmatpush1.msra.mxu0 %v682
    %1386 = vmatprep.subr.mxu0 0.0
    %1387 = vmatpush1.msra.mxu0 0.0
    %1388 = vmatprep.subr.mxu0 0.0
    %1389 = vmatpush1.msra.mxu0 0.0
    %1390 = vmatprep.subr.mxu0 0.0
    %1391 = vmatpush1.msra.mxu0 0.0
    %1392 = vmatprep.subr.mxu0 0.0
    %1393 = vmatpush1.msra.mxu0 0.0
    %1394 = vmatprep.subr.mxu0 0.0
    %1395 = vmatpush1.msra.mxu0 0.0
    %1396 = vmatprep.subr.mxu0 0.0
    %1397 = vmatpush1.msra.mxu0 0.0
    %1398 = vmatprep.subr.mxu0 0.0
    %1399 = vmatpush1.msra.mxu0 0.0
    %1400 = vmatprep.subr.mxu0 0.0
    %1401 = vmatpush1.msra.mxu0 0.0
    %1402 = vmatprep.subr.mxu0 0.0
    %1403 = vmatpush1.msra.mxu0 0.0
    %1404 = vmatprep.subr.mxu0 0.0
    %1405 = vmatpush1.msra.mxu0 0.0
    %1406 = vmatprep.subr.mxu0 0.0
    %1407 = vmatpush1.msra.mxu0 0.0
    %1408 = vmatprep.subr.mxu0 0.0
    %1409 = vmatpush1.msra.mxu0 0.0
    %1410 = vmatprep.subr.mxu0 0.0
    %1411 = vmatpush1.msra.mxu0 0.0
    %1412 = vmatprep.subr.mxu0 0.0
    %1413 = vmatpush1.msra.mxu0 0.0
    %1414 = vmatprep.subr.mxu0 0.0
    %1415 = vmatpush1.msra.mxu0 0.0
    %1416 = vmatprep.subr.mxu0 0.0
    %1417 = vmatpush1.msra.mxu0 0.0
    %1418 = vmatprep.mubr.f32.mxu0 0.0
    %1419 = vmatmul.mubr.f32.gmra.mrb[0].mxu0 %v1352
    %v1420 = vpop.f32.mrb[0].mxu0
    %v1421 = vadd.f32 %v690, %v1420
    %v1422 = vpop.f32.mrb[0].mxu0
    %v1423 = vadd.f32 %v694, %v1422
    %1424 = vdwg.mxu0
    %1425 = vmatprep.subr.mxu0 0.0
    %1426 = vmatpush1.msra.mxu0 %v639
    %1427 = vmatprep.subr.mxu0 0.0
    %1428 = vmatpush1.msra.mxu0 %v642
    %1429 = vmatprep.subr.mxu0 0.0
    %1430 = vmatpush1.msra.mxu0 %v645
    %1431 = vmatprep.subr.mxu0 0.0
    %1432 = vmatpush1.msra.mxu0 %v648
    %1433 = vmatprep.subr.mxu0 0.0
    %1434 = vmatpush1.msra.mxu0 %v651
    %1435 = vmatprep.subr.mxu0 0.0
    %1436 = vmatpush1.msra.mxu0 %v654
    %1437 = vmatprep.subr.mxu0 0.0
    %1438 = vmatpush1.msra.mxu0 %v657
    %1439 = vmatprep.subr.mxu0 0.0
    %1440 = vmatpush1.msra.mxu0 %v660
    %1441 = vmatprep.subr.mxu0 0.0
    %1442 = vmatpush1.msra.mxu0 %v663
    %1443 = vmatprep.subr.mxu0 0.0
    %1444 = vmatpush1.msra.mxu0 %v666
    %1445 = vmatprep.subr.mxu0 0.0
    %1446 = vmatpush1.msra.mxu0 %v669
    %1447 = vmatprep.subr.mxu0 0.0
    %1448 = vmatpush1.msra.mxu0 %v672
    %1449 = vmatprep.subr.mxu0 0.0
    %1450 = vmatpush1.msra.mxu0 %v675
    %1451 = vmatprep.subr.mxu0 0.0
    %1452 = vmatpush1.msra.mxu0 %v678
    %1453 = vmatprep.subr.mxu0 0.0
    %1454 = vmatpush1.msra.mxu0 %v681
    %1455 = vmatprep.subr.mxu0 0.0
    %1456 = vmatpush1.msra.mxu0 %v684
    %1457 = vmatprep.subr.mxu0 0.0
    %1458 = vmatpush1.msra.mxu0 0.0
    %1459 = vmatprep.subr.mxu0 0.0
    %1460 = vmatpush1.msra.mxu0 0.0
    %1461 = vmatprep.subr.mxu0 0.0
    %1462 = vmatpush1.msra.mxu0 0.0
    %1463 = vmatprep.subr.mxu0 0.0
    %1464 = vmatpush1.msra.mxu0 0.0
    %1465 = vmatprep.subr.mxu0 0.0
    %1466 = vmatpush1.msra.mxu0 0.0
    %1467 = vmatprep.subr.mxu0 0.0
    %1468 = vmatpush1.msra.mxu0 0.0
    %1469 = vmatprep.subr.mxu0 0.0
    %1470 = vmatpush1.msra.mxu0 0.0
    %1471 = vmatprep.subr.mxu0 0.0
    %1472 = vmatpush1.msra.mxu0 0.0
    %1473 = vmatprep.subr.mxu0 0.0
    %1474 = vmatpush1.msra.mxu0 0.0
    %1475 = vmatprep.subr.mxu0 0.0
    %1476 = vmatpush1.msra.mxu0 0.0
    %1477 = vmatprep.subr.mxu0 0.0
    %1478 = vmatpush1.msra.mxu0 0.0
    %1479 = vmatprep.subr.mxu0 0.0
    %1480 = vmatpush1.msra.mxu0 0.0
    %1481 = vmatprep.subr.mxu0 0.0
    %1482 = vmatpush1.msra.mxu0 0.0
    %1483 = vmatprep.subr.mxu0 0.0
    %1484 = vmatpush1.msra.mxu0 0.0
    %1485 = vmatprep.subr.mxu0 0.0
    %1486 = vmatpush1.msra.mxu0 0.0
    %1487 = vmatprep.subr.mxu0 0.0
    %1488 = vmatpush1.msra.mxu0 0.0
    %1489 = vmatprep.mubr.f32.mxu0 0.0
    %1490 = vmatmul.mubr.f32.gmra.mrb[0].mxu0 %v1352
    %v1491 = vpop.f32.mrb[0].mxu0
    %v1492 = vadd.f32 %v698, %v1491
    %v1493 = vpop.f32.mrb[0].mxu0
    %1494 = vdwg.mxu0
    %v1495 = vadd.f32 %v510, %v1421
    %v1496 = vadd.f32 %v512, %v1423
    %v1497 = vxor.u32 %v1495, 2147483648
    %v1498 = vxor.u32 %v1496, 2147483648
    %v1499 = vmul.f32 %v1497, 1.442695
    %v1500 = vpow.pop %v1499
    %v1501 = vmul.f32 %v1498, 1.442695
    %v1502 = vpow.pop %v1501
    %v1503 = vadd.f32 %v1500, 1.0
    %v1504 = vadd.f32 %v1502, 1.0
    %v1505 = vrcp.pop %v1503
    %v1506 = vmul.f32 1.0, %v1505
    %v1507 = vrcp.pop %v1504
    %v1508 = vmul.f32 1.0, %v1507
    %v1509 = vmul.f32 %v1506, %v1492
    %v1510 = vadd.f32 %v619, %v1509
    %v1511 = vtanh.pop %v1510
    %v1512 = vsub.f32 1.0, %v1508
    %v1513 = vmul.f32 %v1512, %v1511
    %v1514 = vmul.f32 %v1508, %v1352
    %v1515 = vadd.f32 %v1513, %v1514
    %1516 = vst [vmem:[#allocation2 + $0x20] sm:$0xff] %v1515
    %1517 = vmatprep.subr.mxu0 %v638
    %1518 = vmatpush1.msra.mxu0 %v637
    %1519 = vmatprep.subr.mxu0 %v641
    %1520 = vmatpush1.msra.mxu0 %v640
    %1521 = vmatprep.subr.mxu0 %v644
    %1522 = vmatpush1.msra.mxu0 %v643
    %1523 = vmatprep.subr.mxu0 %v647
    %1524 = vmatpush1.msra.mxu0 %v646
    %1525 = vmatprep.subr.mxu0 %v650
    %1526 = vmatpush1.msra.mxu0 %v649
    %1527 = vmatprep.subr.mxu0 %v653
    %1528 = vmatpush1.msra.mxu0 %v652
    %1529 = vmatprep.subr.mxu0 %v656
    %1530 = vmatpush1.msra.mxu0 %v655
    %1531 = vmatprep.subr.mxu0 %v659
    %1532 = vmatpush1.msra.mxu0 %v658
    %1533 = vmatprep.subr.mxu0 %v662
    %1534 = vmatpush1.msra.mxu0 %v661
    %1535 = vmatprep.subr.mxu0 %v665
    %1536 = vmatpush1.msra.mxu0 %v664
    %1537 = vmatprep.subr.mxu0 %v668
    %1538 = vmatpush1.msra.mxu0 %v667
    %1539 = vmatprep.subr.mxu0 %v671
    %1540 = vmatpush1.msra.mxu0 %v670
    %1541 = vmatprep.subr.mxu0 %v674
    %1542 = vmatpush1.msra.mxu0 %v673
    %1543 = vmatprep.subr.mxu0 %v677
    %1544 = vmatpush1.msra.mxu0 %v676
    %1545 = vmatprep.subr.mxu0 %v680
    %1546 = vmatpush1.msra.mxu0 %v679
    %1547 = vmatprep.subr.mxu0 %v683
    %1548 = vmatpush1.msra.mxu0 %v682
    %1549 = vmatprep.subr.mxu0 0.0
    %1550 = vmatpush1.msra.mxu0 0.0
    %1551 = vmatprep.subr.mxu0 0.0
    %1552 = vmatpush1.msra.mxu0 0.0
    %1553 = vmatprep.subr.mxu0 0.0
    %1554 = vmatpush1.msra.mxu0 0.0
    %1555 = vmatprep.subr.mxu0 0.0
    %1556 = vmatpush1.msra.mxu0 0.0
    %1557 = vmatprep.subr.mxu0 0.0
    %1558 = vmatpush1.msra.mxu0 0.0
    %1559 = vmatprep.subr.mxu0 0.0
    %1560 = vmatpush1.msra.mxu0 0.0
    %1561 = vmatprep.subr.mxu0 0.0
    %1562 = vmatpush1.msra.mxu0 0.0
    %1563 = vmatprep.subr.mxu0 0.0
    %1564 = vmatpush1.msra.mxu0 0.0
    %1565 = vmatprep.subr.mxu0 0.0
    %1566 = vmatpush1.msra.mxu0 0.0
    %1567 = vmatprep.subr.mxu0 0.0
    %1568 = vmatpush1.msra.mxu0 0.0
    %1569 = vmatprep.subr.mxu0 0.0
    %1570 = vmatpush1.msra.mxu0 0.0
    %1571 = vmatprep.subr.mxu0 0.0
    %1572 = vmatpush1.msra.mxu0 0.0
    %1573 = vmatprep.subr.mxu0 0.0
    %1574 = vmatpush1.msra.mxu0 0.0
    %1575 = vmatprep.subr.mxu0 0.0
    %1576 = vmatpush1.msra.mxu0 0.0
    %1577 = vmatprep.subr.mxu0 0.0
    %1578 = vmatpush1.msra.mxu0 0.0
    %1579 = vmatprep.subr.mxu0 0.0
    %1580 = vmatpush1.msra.mxu0 0.0
    %1581 = vmatprep.mubr.f32.mxu0 0.0
    %1582 = vmatmul.mubr.f32.gmra.mrb[0].mxu0 %v1515
    %v1583 = vpop.f32.mrb[0].mxu0
    %v1584 = vadd.f32 %v690, %v1583
    %v1585 = vpop.f32.mrb[0].mxu0
    %v1586 = vadd.f32 %v694, %v1585
    %1587 = vdwg.mxu0
    %1588 = vmatprep.subr.mxu0 0.0
    %1589 = vmatpush1.msra.mxu0 %v639
    %1590 = vmatprep.subr.mxu0 0.0
    %1591 = vmatpush1.msra.mxu0 %v642
    %1592 = vmatprep.subr.mxu0 0.0
    %1593 = vmatpush1.msra.mxu0 %v645
    %1594 = vmatprep.subr.mxu0 0.0
    %1595 = vmatpush1.msra.mxu0 %v648
    %1596 = vmatprep.subr.mxu0 0.0
    %1597 = vmatpush1.msra.mxu0 %v651
    %1598 = vmatprep.subr.mxu0 0.0
    %1599 = vmatpush1.msra.mxu0 %v654
    %1600 = vmatprep.subr.mxu0 0.0
    %1601 = vmatpush1.msra.mxu0 %v657
    %1602 = vmatprep.subr.mxu0 0.0
    %1603 = vmatpush1.msra.mxu0 %v660
    %1604 = vmatprep.subr.mxu0 0.0
    %1605 = vmatpush1.msra.mxu0 %v663
    %1606 = vmatprep.subr.mxu0 0.0
    %1607 = vmatpush1.msra.mxu0 %v666
    %1608 = vmatprep.subr.mxu0 0.0
    %1609 = vmatpush1.msra.mxu0 %v669
    %1610 = vmatprep.subr.mxu0 0.0
    %1611 = vmatpush1.msra.mxu0 %v672
    %1612 = vmatprep.subr.mxu0 0.0
    %1613 = vmatpush1.msra.mxu0 %v675
    %1614 = vmatprep.subr.mxu0 0.0
    %1615 = vmatpush1.msra.mxu0 %v678
    %1616 = vmatprep.subr.mxu0 0.0
    %1617 = vmatpush1.msra.mxu0 %v681
    %1618 = vmatprep.subr.mxu0 0.0
    %1619 = vmatpush1.msra.mxu0 %v684
    %1620 = vmatprep.subr.mxu0 0.0
    %1621 = vmatpush1.msra.mxu0 0.0
    %1622 = vmatprep.subr.mxu0 0.0
    %1623 = vmatpush1.msra.mxu0 0.0
    %1624 = vmatprep.subr.mxu0 0.0
    %1625 = vmatpush1.msra.mxu0 0.0
    %1626 = vmatprep.subr.mxu0 0.0
    %1627 = vmatpush1.msra.mxu0 0.0
    %1628 = vmatprep.subr.mxu0 0.0
    %1629 = vmatpush1.msra.mxu0 0.0
    %1630 = vmatprep.subr.mxu0 0.0
    %1631 = vmatpush1.msra.mxu0 0.0
    %1632 = vmatprep.subr.mxu0 0.0
    %1633 = vmatpush1.msra.mxu0 0.0
    %1634 = vmatprep.subr.mxu0 0.0
    %1635 = vmatpush1.msra.mxu0 0.0
    %1636 = vmatprep.subr.mxu0 0.0
    %1637 = vmatpush1.msra.mxu0 0.0
    %1638 = vmatprep.subr.mxu0 0.0
    %1639 = vmatpush1.msra.mxu0 0.0
    %1640 = vmatprep.subr.mxu0 0.0
    %1641 = vmatpush1.msra.mxu0 0.0
    %1642 = vmatprep.subr.mxu0 0.0
    %1643 = vmatpush1.msra.mxu0 0.0
    %1644 = vmatprep.subr.mxu0 0.0
    %1645 = vmatpush1.msra.mxu0 0.0
    %1646 = vmatprep.subr.mxu0 0.0
    %1647 = vmatpush1.msra.mxu0 0.0
    %1648 = vmatprep.subr.mxu0 0.0
    %1649 = vmatpush1.msra.mxu0 0.0
    %1650 = vmatprep.subr.mxu0 0.0
    %1651 = vmatpush1.msra.mxu0 0.0
    %1652 = vmatprep.mubr.f32.mxu0 0.0
    %1653 = vmatmul.mubr.f32.gmra.mrb[0].mxu0 %v1515
    %v1654 = vpop.f32.mrb[0].mxu0
    %v1655 = vadd.f32 %v698, %v1654
    %v1656 = vpop.f32.mrb[0].mxu0
    %1657 = vdwg.mxu0
    %v1658 = vadd.f32 %v516, %v1584
    %v1659 = vadd.f32 %v518, %v1586
    %v1660 = vxor.u32 %v1658, 2147483648
    %v1661 = vxor.u32 %v1659, 2147483648
    %v1662 = vmul.f32 %v1660, 1.442695
    %v1663 = vpow.pop %v1662
    %v1664 = vmul.f32 %v1661, 1.442695
    %v1665 = vpow.pop %v1664
    %v1666 = vadd.f32 %v1663, 1.0
    %v1667 = vadd.f32 %v1665, 1.0
    %v1668 = vrcp.pop %v1666
    %v1669 = vmul.f32 1.0, %v1668
    %v1670 = vrcp.pop %v1667
    %v1671 = vmul.f32 1.0, %v1670
    %v1672 = vmul.f32 %v1669, %v1655
    %v1673 = vadd.f32 %v624, %v1672
    %v1674 = vtanh.pop %v1673
    %v1675 = vsub.f32 1.0, %v1671
    %v1676 = vmul.f32 %v1675, %v1674
    %v1677 = vmul.f32 %v1671, %v1515
    %v1678 = vadd.f32 %v1676, %v1677
    %1679 = vst [vmem:[#allocation2 + $0x28] sm:$0xff] %v1678
    %1680 = vmatprep.subr.mxu0 %v638
    %1681 = vmatpush1.msra.mxu0 %v637
    %1682 = vmatprep.subr.mxu0 %v641
    %1683 = vmatpush1.msra.mxu0 %v640
    %1684 = vmatprep.subr.mxu0 %v644
    %1685 = vmatpush1.msra.mxu0 %v643
    %1686 = vmatprep.subr.mxu0 %v647
    %1687 = vmatpush1.msra.mxu0 %v646
    %1688 = vmatprep.subr.mxu0 %v650
    %1689 = vmatpush1.msra.mxu0 %v649
    %1690 = vmatprep.subr.mxu0 %v653
    %1691 = vmatpush1.msra.mxu0 %v652
    %1692 = vmatprep.subr.mxu0 %v656
    %1693 = vmatpush1.msra.mxu0 %v655
    %1694 = vmatprep.subr.mxu0 %v659
    %1695 = vmatpush1.msra.mxu0 %v658
    %1696 = vmatprep.subr.mxu0 %v662
    %1697 = vmatpush1.msra.mxu0 %v661
    %1698 = vmatprep.subr.mxu0 %v665
    %1699 = vmatpush1.msra.mxu0 %v664
    %1700 = vmatprep.subr.mxu0 %v668
    %1701 = vmatpush1.msra.mxu0 %v667
    %1702 = vmatprep.subr.mxu0 %v671
    %1703 = vmatpush1.msra.mxu0 %v670
    %1704 = vmatprep.subr.mxu0 %v674
    %1705 = vmatpush1.msra.mxu0 %v673
    %1706 = vmatprep.subr.mxu0 %v677
    %1707 = vmatpush1.msra.mxu0 %v676
    %1708 = vmatprep.subr.mxu0 %v680
    %1709 = vmatpush1.msra.mxu0 %v679
    %1710 = vmatprep.subr.mxu0 %v683
    %1711 = vmatpush1.msra.mxu0 %v682
    %1712 = vmatprep.subr.mxu0 0.0
    %1713 = vmatpush1.msra.mxu0 0.0
    %1714 = vmatprep.subr.mxu0 0.0
    %1715 = vmatpush1.msra.mxu0 0.0
    %1716 = vmatprep.subr.mxu0 0.0
    %1717 = vmatpush1.msra.mxu0 0.0
    %1718 = vmatprep.subr.mxu0 0.0
    %1719 = vmatpush1.msra.mxu0 0.0
    %1720 = vmatprep.subr.mxu0 0.0
    %1721 = vmatpush1.msra.mxu0 0.0
    %1722 = vmatprep.subr.mxu0 0.0
    %1723 = vmatpush1.msra.mxu0 0.0
    %1724 = vmatprep.subr.mxu0 0.0
    %1725 = vmatpush1.msra.mxu0 0.0
    %1726 = vmatprep.subr.mxu0 0.0
    %1727 = vmatpush1.msra.mxu0 0.0
    %1728 = vmatprep.subr.mxu0 0.0
    %1729 = vmatpush1.msra.mxu0 0.0
    %1730 = vmatprep.subr.mxu0 0.0
    %1731 = vmatpush1.msra.mxu0 0.0
    %1732 = vmatprep.subr.mxu0 0.0
    %1733 = vmatpush1.msra.mxu0 0.0
    %1734 = vmatprep.subr.mxu0 0.0
    %1735 = vmatpush1.msra.mxu0 0.0
    %1736 = vmatprep.subr.mxu0 0.0
    %1737 = vmatpush1.msra.mxu0 0.0
    %1738 = vmatprep.subr.mxu0 0.0
    %1739 = vmatpush1.msra.mxu0 0.0
    %1740 = vmatprep.subr.mxu0 0.0
    %1741 = vmatpush1.msra.mxu0 0.0
    %1742 = vmatprep.subr.mxu0 0.0
    %1743 = vmatpush1.msra.mxu0 0.0
    %1744 = vmatprep.mubr.f32.mxu0 0.0
    %1745 = vmatmul.mubr.f32.gmra.mrb[0].mxu0 %v1678
    %v1746 = vpop.f32.mrb[0].mxu0
    %v1747 = vadd.f32 %v690, %v1746
    %v1748 = vpop.f32.mrb[0].mxu0
    %v1749 = vadd.f32 %v694, %v1748
    %1750 = vdwg.mxu0
    %1751 = vmatprep.subr.mxu0 0.0
    %1752 = vmatpush1.msra.mxu0 %v639
    %1753 = vmatprep.subr.mxu0 0.0
    %1754 = vmatpush1.msra.mxu0 %v642
    %1755 = vmatprep.subr.mxu0 0.0
    %1756 = vmatpush1.msra.mxu0 %v645
    %1757 = vmatprep.subr.mxu0 0.0
    %1758 = vmatpush1.msra.mxu0 %v648
    %1759 = vmatprep.subr.mxu0 0.0
    %1760 = vmatpush1.msra.mxu0 %v651
    %1761 = vmatprep.subr.mxu0 0.0
    %1762 = vmatpush1.msra.mxu0 %v654
    %1763 = vmatprep.subr.mxu0 0.0
    %1764 = vmatpush1.msra.mxu0 %v657
    %1765 = vmatprep.subr.mxu0 0.0
    %1766 = vmatpush1.msra.mxu0 %v660
    %1767 = vmatprep.subr.mxu0 0.0
    %1768 = vmatpush1.msra.mxu0 %v663
    %1769 = vmatprep.subr.mxu0 0.0
    %1770 = vmatpush1.msra.mxu0 %v666
    %1771 = vmatprep.subr.mxu0 0.0
    %1772 = vmatpush1.msra.mxu0 %v669
    %1773 = vmatprep.subr.mxu0 0.0
    %1774 = vmatpush1.msra.mxu0 %v672
    %1775 = vmatprep.subr.mxu0 0.0
    %1776 = vmatpush1.msra.mxu0 %v675
    %1777 = vmatprep.subr.mxu0 0.0
    %1778 = vmatpush1.msra.mxu0 %v678
    %1779 = vmatprep.subr.mxu0 0.0
    %1780 = vmatpush1.msra.mxu0 %v681
    %1781 = vmatprep.subr.mxu0 0.0
    %1782 = vmatpush1.msra.mxu0 %v684
    %1783 = vmatprep.subr.mxu0 0.0
    %1784 = vmatpush1.msra.mxu0 0.0
    %1785 = vmatprep.subr.mxu0 0.0
    %1786 = vmatpush1.msra.mxu0 0.0
    %1787 = vmatprep.subr.mxu0 0.0
    %1788 = vmatpush1.msra.mxu0 0.0
    %1789 = vmatprep.subr.mxu0 0.0
    %1790 = vmatpush1.msra.mxu0 0.0
    %1791 = vmatprep.subr.mxu0 0.0
    %1792 = vmatpush1.msra.mxu0 0.0
    %1793 = vmatprep.subr.mxu0 0.0
    %1794 = vmatpush1.msra.mxu0 0.0
    %1795 = vmatprep.subr.mxu0 0.0
    %1796 = vmatpush1.msra.mxu0 0.0
    %1797 = vmatprep.subr.mxu0 0.0
    %1798 = vmatpush1.msra.mxu0 0.0
    %1799 = vmatprep.subr.mxu0 0.0
    %1800 = vmatpush1.msra.mxu0 0.0
    %1801 = vmatprep.subr.mxu0 0.0
    %1802 = vmatpush1.msra.mxu0 0.0
    %1803 = vmatprep.subr.mxu0 0.0
    %1804 = vmatpush1.msra.mxu0 0.0
    %1805 = vmatprep.subr.mxu0 0.0
    %1806 = vmatpush1.msra.mxu0 0.0
    %1807 = vmatprep.subr.mxu0 0.0
    %1808 = vmatpush1.msra.mxu0 0.0
    %1809 = vmatprep.subr.mxu0 0.0
    %1810 = vmatpush1.msra.mxu0 0.0
    %1811 = vmatprep.subr.mxu0 0.0
    %1812 = vmatpush1.msra.mxu0 0.0
    %1813 = vmatprep.subr.mxu0 0.0
    %1814 = vmatpush1.msra.mxu0 0.0
    %1815 = vmatprep.mubr.f32.mxu0 0.0
    %1816 = vmatmul.mubr.f32.gmra.mrb[0].mxu0 %v1678
    %v1817 = vpop.f32.mrb[0].mxu0
    %v1818 = vadd.f32 %v698, %v1817
    %v1819 = vpop.f32.mrb[0].mxu0
    %1820 = vdwg.mxu0
    %v1821 = vadd.f32 %v522, %v1747
    %v1822 = vadd.f32 %v524, %v1749
    %v1823 = vxor.u32 %v1821, 2147483648
    %v1824 = vxor.u32 %v1822, 2147483648
    %v1825 = vmul.f32 %v1823, 1.442695
    %v1826 = vpow.pop %v1825
    %v1827 = vmul.f32 %v1824, 1.442695
    %v1828 = vpow.pop %v1827
    %v1829 = vadd.f32 %v1826, 1.0
    %v1830 = vadd.f32 %v1828, 1.0
    %v1831 = vrcp.pop %v1829
    %v1832 = vmul.f32 1.0, %v1831
    %v1833 = vrcp.pop %v1830
    %v1834 = vmul.f32 1.0, %v1833
    %v1835 = vmul.f32 %v1832, %v1818
    %v1836 = vadd.f32 %v629, %v1835
    %v1837 = vtanh.pop %v1836
    %v1838 = vsub.f32 1.0, %v1834
    %v1839 = vmul.f32 %v1838, %v1837
    %v1840 = vmul.f32 %v1834, %v1678
    %v1841 = vadd.f32 %v1839, %v1840
    %1842 = vst [vmem:[#allocation2 + $0x30] sm:$0xff] %v1841
    %1843 = vmatprep.subr.mxu0 %v638
    %1844 = vmatpush1.msra.mxu0 %v637
    %1845 = vmatprep.subr.mxu0 %v641
    %1846 = vmatpush1.msra.mxu0 %v640
    %1847 = vmatprep.subr.mxu0 %v644
    %1848 = vmatpush1.msra.mxu0 %v643
    %1849 = vmatprep.subr.mxu0 %v647
    %1850 = vmatpush1.msra.mxu0 %v646
    %1851 = vmatprep.subr.mxu0 %v650
    %1852 = vmatpush1.msra.mxu0 %v649
    %1853 = vmatprep.subr.mxu0 %v653
    %1854 = vmatpush1.msra.mxu0 %v652
    %1855 = vmatprep.subr.mxu0 %v656
    %1856 = vmatpush1.msra.mxu0 %v655
    %1857 = vmatprep.subr.mxu0 %v659
    %1858 = vmatpush1.msra.mxu0 %v658
    %1859 = vmatprep.subr.mxu0 %v662
    %1860 = vmatpush1.msra.mxu0 %v661
    %1861 = vmatprep.subr.mxu0 %v665
    %1862 = vmatpush1.msra.mxu0 %v664
    %1863 = vmatprep.subr.mxu0 %v668
    %1864 = vmatpush1.msra.mxu0 %v667
    %1865 = vmatprep.subr.mxu0 %v671
    %1866 = vmatpush1.msra.mxu0 %v670
    %1867 = vmatprep.subr.mxu0 %v674
    %1868 = vmatpush1.msra.mxu0 %v673
    %1869 = vmatprep.subr.mxu0 %v677
    %1870 = vmatpush1.msra.mxu0 %v676
    %1871 = vmatprep.subr.mxu0 %v680
    %1872 = vmatpush1.msra.mxu0 %v679
    %1873 = vmatprep.subr.mxu0 %v683
    %1874 = vmatpush1.msra.mxu0 %v682
    %1875 = vmatprep.subr.mxu0 0.0
    %1876 = vmatpush1.msra.mxu0 0.0
    %1877 = vmatprep.subr.mxu0 0.0
    %1878 = vmatpush1.msra.mxu0 0.0
    %1879 = vmatprep.subr.mxu0 0.0
    %1880 = vmatpush1.msra.mxu0 0.0
    %1881 = vmatprep.subr.mxu0 0.0
    %1882 = vmatpush1.msra.mxu0 0.0
    %1883 = vmatprep.subr.mxu0 0.0
    %1884 = vmatpush1.msra.mxu0 0.0
    %1885 = vmatprep.subr.mxu0 0.0
    %1886 = vmatpush1.msra.mxu0 0.0
    %1887 = vmatprep.subr.mxu0 0.0
    %1888 = vmatpush1.msra.mxu0 0.0
    %1889 = vmatprep.subr.mxu0 0.0
    %1890 = vmatpush1.msra.mxu0 0.0
    %1891 = vmatprep.subr.mxu0 0.0
    %1892 = vmatpush1.msra.mxu0 0.0
    %1893 = vmatprep.subr.mxu0 0.0
    %1894 = vmatpush1.msra.mxu0 0.0
    %1895 = vmatprep.subr.mxu0 0.0
    %1896 = vmatpush1.msra.mxu0 0.0
    %1897 = vmatprep.subr.mxu0 0.0
    %1898 = vmatpush1.msra.mxu0 0.0
    %1899 = vmatprep.subr.mxu0 0.0
    %1900 = vmatpush1.msra.mxu0 0.0
    %1901 = vmatprep.subr.mxu0 0.0
    %1902 = vmatpush1.msra.mxu0 0.0
    %1903 = vmatprep.subr.mxu0 0.0
    %1904 = vmatpush1.msra.mxu0 0.0
    %1905 = vmatprep.subr.mxu0 0.0
    %1906 = vmatpush1.msra.mxu0 0.0
    %1907 = vmatprep.mubr.f32.mxu0 0.0
    %1908 = vmatmul.mubr.f32.gmra.mrb[0].mxu0 %v1841
    %v1909 = vpop.f32.mrb[0].mxu0
    %v1910 = vadd.f32 %v690, %v1909
    %v1911 = vpop.f32.mrb[0].mxu0
    %v1912 = vadd.f32 %v694, %v1911
    %1913 = vdwg.mxu0
    %1914 = vmatprep.subr.mxu0 0.0
    %1915 = vmatpush1.msra.mxu0 %v639
    %1916 = vmatprep.subr.mxu0 0.0
    %1917 = vmatpush1.msra.mxu0 %v642
    %1918 = vmatprep.subr.mxu0 0.0
    %1919 = vmatpush1.msra.mxu0 %v645
    %1920 = vmatprep.subr.mxu0 0.0
    %1921 = vmatpush1.msra.mxu0 %v648
    %1922 = vmatprep.subr.mxu0 0.0
    %1923 = vmatpush1.msra.mxu0 %v651
    %1924 = vmatprep.subr.mxu0 0.0
    %1925 = vmatpush1.msra.mxu0 %v654
    %1926 = vmatprep.subr.mxu0 0.0
    %1927 = vmatpush1.msra.mxu0 %v657
    %1928 = vmatprep.subr.mxu0 0.0
    %1929 = vmatpush1.msra.mxu0 %v660
    %1930 = vmatprep.subr.mxu0 0.0
    %1931 = vmatpush1.msra.mxu0 %v663
    %1932 = vmatprep.subr.mxu0 0.0
    %1933 = vmatpush1.msra.mxu0 %v666
    %1934 = vmatprep.subr.mxu0 0.0
    %1935 = vmatpush1.msra.mxu0 %v669
    %1936 = vmatprep.subr.mxu0 0.0
    %1937 = vmatpush1.msra.mxu0 %v672
    %1938 = vmatprep.subr.mxu0 0.0
    %1939 = vmatpush1.msra.mxu0 %v675
    %1940 = vmatprep.subr.mxu0 0.0
    %1941 = vmatpush1.msra.mxu0 %v678
    %1942 = vmatprep.subr.mxu0 0.0
    %1943 = vmatpush1.msra.mxu0 %v681
    %1944 = vmatprep.subr.mxu0 0.0
    %1945 = vmatpush1.msra.mxu0 %v684
    %1946 = vmatprep.subr.mxu0 0.0
    %1947 = vmatpush1.msra.mxu0 0.0
    %1948 = vmatprep.subr.mxu0 0.0
    %1949 = vmatpush1.msra.mxu0 0.0
    %1950 = vmatprep.subr.mxu0 0.0
    %1951 = vmatpush1.msra.mxu0 0.0
    %1952 = vmatprep.subr.mxu0 0.0
    %1953 = vmatpush1.msra.mxu0 0.0
    %1954 = vmatprep.subr.mxu0 0.0
    %1955 = vmatpush1.msra.mxu0 0.0
    %1956 = vmatprep.subr.mxu0 0.0
    %1957 = vmatpush1.msra.mxu0 0.0
    %1958 = vmatprep.subr.mxu0 0.0
    %1959 = vmatpush1.msra.mxu0 0.0
    %1960 = vmatprep.subr.mxu0 0.0
    %1961 = vmatpush1.msra.mxu0 0.0
    %1962 = vmatprep.subr.mxu0 0.0
    %1963 = vmatpush1.msra.mxu0 0.0
    %1964 = vmatprep.subr.mxu0 0.0
    %1965 = vmatpush1.msra.mxu0 0.0
    %1966 = vmatprep.subr.mxu0 0.0
    %1967 = vmatpush1.msra.mxu0 0.0
    %1968 = vmatprep.subr.mxu0 0.0
    %1969 = vmatpush1.msra.mxu0 0.0
    %1970 = vmatprep.subr.mxu0 0.0
    %1971 = vmatpush1.msra.mxu0 0.0
    %1972 = vmatprep.subr.mxu0 0.0
    %1973 = vmatpush1.msra.mxu0 0.0
    %1974 = vmatprep.subr.mxu0 0.0
    %1975 = vmatpush1.msra.mxu0 0.0
    %1976 = vmatprep.subr.mxu0 0.0
    %1977 = vmatpush1.msra.mxu0 0.0
    %1978 = vmatprep.mubr.f32.mxu0 0.0
    %1979 = vmatmul.mubr.f32.gmra.mrb[0].mxu0 %v1841
    %v1980 = vpop.f32.mrb[0].mxu0
    %v1981 = vadd.f32 %v698, %v1980
    %v1982 = vpop.f32.mrb[0].mxu0
    %1983 = vdwg.mxu0
    %v1984 = vadd.f32 %v528, %v1910
    %v1985 = vadd.f32 %v530, %v1912
    %v1986 = vxor.u32 %v1984, 2147483648
    %v1987 = vxor.u32 %v1985, 2147483648
    %v1988 = vmul.f32 %v1986, 1.442695
    %v1989 = vpow.pop %v1988
    %v1990 = vmul.f32 %v1987, 1.442695
    %v1991 = vpow.pop %v1990
    %v1992 = vadd.f32 %v1989, 1.0
    %v1993 = vadd.f32 %v1991, 1.0
    %v1994 = vrcp.pop %v1992
    %v1995 = vmul.f32 1.0, %v1994
    %v1996 = vrcp.pop %v1993
    %v1997 = vmul.f32 1.0, %v1996
    %v1998 = vmul.f32 %v1995, %v1981
    %v1999 = vadd.f32 %v634, %v1998
    %v2000 = vtanh.pop %v1999
    %v2001 = vsub.f32 1.0, %v1997
    %v2002 = vmul.f32 %v2001, %v2000
    %v2003 = vmul.f32 %v1997, %v1841
    %v2004 = vadd.f32 %v2002, %v2003
    %2005 = vst [vmem:[#allocation2 + $0x38] sm:$0xff] %v2004
    %v2006 = vld [vmem:[#allocation2 + $0x20] sm:$0xff]
    %v2007 = vld [vmem:[#allocation2 + $0x28] sm:$0xff]
    %v2008 = vld [vmem:[#allocation2 + $0x30] sm:$0xff]
    %v2009 = vld [vmem:[#allocation2 + $0x38] sm:$0xff]
    %v2010 = vld [vmem:[%s9] sm:$0xff]
    %v2011 = vld [vmem:[%s9 + $0x8] sm:$0xff]
    %v2012 = vld [vmem:[%s9 + $0x10] sm:$0xff]
    %v2013 = vld [vmem:[%s9 + $0x18] sm:$0xff]
    %v2014 = vld [vmem:[%s9 + $0x20] sm:$0xff]
    %v2015 = vld [vmem:[%s9 + $0x28] sm:$0xff]
    %v2016 = vld [vmem:[%s9 + $0x30] sm:$0xff]
    %v2017 = vld [vmem:[%s9 + $0x38] sm:$0xff]
    %v2018 = vld [vmem:[%s9 + $0x40] sm:$0xff]
    %v2019 = vld [vmem:[%s9 + $0x48] sm:$0xff]
    %v2020 = vld [vmem:[%s9 + $0x50] sm:$0xff]
    %v2021 = vld [vmem:[%s9 + $0x58] sm:$0xff]
    %v2022 = vld [vmem:[%s9 + $0x60] sm:$0xff]
    %v2023 = vld [vmem:[%s9 + $0x68] sm:$0xff]
    %v2024 = vld [vmem:[%s9 + $0x70] sm:$0xff]
    %v2025 = vld [vmem:[%s9 + $0x78] sm:$0xff]
    %v2026 = vld [vmem:[%s10] sm:$0x1]
    %v2028 = vlaneseq
    %v2029 = vshrl.u32 %v2028, 7
    %v2030 = vsub.s32 0, %v2029
    %v2031 = vrot.slane %v2026, %v2030
    %2033 = vmatprep.subr.mxu0 0.0
    %2034 = vmatpush1.msra.mxu0 %v2010
    %2035 = vmatprep.subr.mxu0 0.0
    %2036 = vmatpush1.msra.mxu0 %v2011
    %2037 = vmatprep.subr.mxu0 0.0
    %2038 = vmatpush1.msra.mxu0 %v2012
    %2039 = vmatprep.subr.mxu0 0.0
    %2040 = vmatpush1.msra.mxu0 %v2013
    %2041 = vmatprep.subr.mxu0 0.0
    %2042 = vmatpush1.msra.mxu0 %v2014
    %2043 = vmatprep.subr.mxu0 0.0
    %2044 = vmatpush1.msra.mxu0 %v2015
    %2045 = vmatprep.subr.mxu0 0.0
    %2046 = vmatpush1.msra.mxu0 %v2016
    %2047 = vmatprep.subr.mxu0 0.0
    %2048 = vmatpush1.msra.mxu0 %v2017
    %2049 = vmatprep.subr.mxu0 0.0
    %2050 = vmatpush1.msra.mxu0 %v2018
    %2051 = vmatprep.subr.mxu0 0.0
    %2052 = vmatpush1.msra.mxu0 %v2019
    %2053 = vmatprep.subr.mxu0 0.0
    %2054 = vmatpush1.msra.mxu0 %v2020
    %2055 = vmatprep.subr.mxu0 0.0
    %2056 = vmatpush1.msra.mxu0 %v2021
    %2057 = vmatprep.subr.mxu0 0.0
    %2058 = vmatpush1.msra.mxu0 %v2022
    %2059 = vmatprep.subr.mxu0 0.0
    %2060 = vmatpush1.msra.mxu0 %v2023
    %2061 = vmatprep.subr.mxu0 0.0
    %2062 = vmatpush1.msra.mxu0 %v2024
    %2063 = vmatprep.subr.mxu0 0.0
    %2064 = vmatpush1.msra.mxu0 %v2025
    %2065 = vmatprep.subr.mxu0 0.0
    %2066 = vmatpush1.msra.mxu0 0.0
    %2067 = vmatprep.subr.mxu0 0.0
    %2068 = vmatpush1.msra.mxu0 0.0
    %2069 = vmatprep.subr.mxu0 0.0
    %2070 = vmatpush1.msra.mxu0 0.0
    %2071 = vmatprep.subr.mxu0 0.0
    %2072 = vmatpush1.msra.mxu0 0.0
    %2073 = vmatprep.subr.mxu0 0.0
    %2074 = vmatpush1.msra.mxu0 0.0
    %2075 = vmatprep.subr.mxu0 0.0
    %2076 = vmatpush1.msra.mxu0 0.0
    %2077 = vmatprep.subr.mxu0 0.0
    %2078 = vmatpush1.msra.mxu0 0.0
    %2079 = vmatprep.subr.mxu0 0.0
    %2080 = vmatpush1.msra.mxu0 0.0
    %2081 = vmatprep.subr.mxu0 0.0
    %2082 = vmatpush1.msra.mxu0 0.0
    %2083 = vmatprep.subr.mxu0 0.0
    %2084 = vmatpush1.msra.mxu0 0.0
    %2085 = vmatprep.subr.mxu0 0.0
    %2086 = vmatpush1.msra.mxu0 0.0
    %2087 = vmatprep.subr.mxu0 0.0
    %2088 = vmatpush1.msra.mxu0 0.0
    %2089 = vmatprep.subr.mxu0 0.0
    %2090 = vmatpush1.msra.mxu0 0.0
    %2091 = vmatprep.subr.mxu0 0.0
    %2092 = vmatpush1.msra.mxu0 0.0
    %2093 = vmatprep.subr.mxu0 0.0
    %2094 = vmatpush1.msra.mxu0 0.0
    %2095 = vmatprep.subr.mxu0 0.0
    %2096 = vmatpush1.msra.mxu0 0.0
    %2097 = vmatprep.mubr.f32.mxu0 0.0
    %2098 = vmatmul.mubr.f32.gmra.mrb[0].mxu0 %v2006
    %v2099 = vpop.f32.mrb[0].mxu0
    %v2100 = vadd.f32 %v2031, %v2099
    %v2101 = vpop.f32.mrb[0].mxu0
    %2102 = vmatprep.mubr.f32.mxu0 0.0
    %2103 = vmatmul.mubr.f32.gmra.mrb[0].mxu0 %v2007
    %v2104 = vpop.f32.mrb[0].mxu0
    %v2105 = vadd.f32 %v2031, %v2104
    %v2106 = vpop.f32.mrb[0].mxu0
    %2107 = vmatprep.mubr.f32.mxu0 0.0
    %2108 = vmatmul.mubr.f32.gmra.mrb[0].mxu0 %v2008
    %v2109 = vpop.f32.mrb[0].mxu0
    %v2110 = vadd.f32 %v2031, %v2109
    %v2111 = vpop.f32.mrb[0].mxu0
    %2112 = vmatprep.mubr.f32.mxu0 0.0
    %2113 = vmatmul.mubr.f32.gmra.mrb[0].mxu0 %v2009
    %v2114 = vpop.f32.mrb[0].mxu0
    %v2115 = vadd.f32 %v2031, %v2114
    %v2116 = vpop.f32.mrb[0].mxu0
    %2117 = vdwg.mxu0
    %v2118 = vld [vmem:[%s11] sm:$0xff]
    %v2119 = vld [vmem:[%s11 + $0x8] sm:$0xff]
    %v2120 = vld [vmem:[%s12] sm:$0x1]
    %v2122 = vlaneseq
    %v2123 = vshrl.u32 %v2122, 7
    %v2124 = vsub.s32 0, %v2123
    %v2125 = vrot.slane %v2120, %v2124
    %vm2127 = vcmask 130048
    %v2129 = vsel %vm2127, %v2100, 0
    %v2132 = vsel %vm2127, %v2105, 0
    %v2135 = vsel %vm2127, %v2110, 0
    %v2138 = vsel %vm2127, %v2115, 0
    %2140 = vmatprep.subr.mxu0 0.0
    %2141 = vmatpush1.msra.mxu0 %v2118
    %2142 = vmatprep.subr.mxu0 0.0
    %2143 = vmatpush1.msra.mxu0 %v2119
    %2144 = vmatprep.subr.mxu0 0.0
    %2145 = vmatpush1.msra.mxu0 0.0
    %2146 = vmatprep.subr.mxu0 0.0
    %2147 = vmatpush1.msra.mxu0 0.0
    %2148 = vmatprep.subr.mxu0 0.0
    %2149 = vmatpush1.msra.mxu0 0.0
    %2150 = vmatprep.subr.mxu0 0.0
    %2151 = vmatpush1.msra.mxu0 0.0
    %2152 = vmatprep.subr.mxu0 0.0
    %2153 = vmatpush1.msra.mxu0 0.0
    %2154 = vmatprep.subr.mxu0 0.0
    %2155 = vmatpush1.msra.mxu0 0.0
    %2156 = vmatprep.subr.mxu0 0.0
    %2157 = vmatpush1.msra.mxu0 0.0
    %2158 = vmatprep.subr.mxu0 0.0
    %2159 = vmatpush1.msra.mxu0 0.0
    %2160 = vmatprep.subr.mxu0 0.0
    %2161 = vmatpush1.msra.mxu0 0.0
    %2162 = vmatprep.subr.mxu0 0.0
    %2163 = vmatpush1.msra.mxu0 0.0
    %2164 = vmatprep.subr.mxu0 0.0
    %2165 = vmatpush1.msra.mxu0 0.0
    %2166 = vmatprep.subr.mxu0 0.0
    %2167 = vmatpush1.msra.mxu0 0.0
    %2168 = vmatprep.subr.mxu0 0.0
    %2169 = vmatpush1.msra.mxu0 0.0
    %2170 = vmatprep.subr.mxu0 0.0
    %2171 = vmatpush1.msra.mxu0 0.0
    %2172 = vmatprep.subr.mxu0 0.0
    %2173 = vmatpush1.msra.mxu0 0.0
    %2174 = vmatprep.subr.mxu0 0.0
    %2175 = vmatpush1.msra.mxu0 0.0
    %2176 = vmatprep.subr.mxu0 0.0
    %2177 = vmatpush1.msra.mxu0 0.0
    %2178 = vmatprep.subr.mxu0 0.0
    %2179 = vmatpush1.msra.mxu0 0.0
    %2180 = vmatprep.subr.mxu0 0.0
    %2181 = vmatpush1.msra.mxu0 0.0
    %2182 = vmatprep.subr.mxu0 0.0
    %2183 = vmatpush1.msra.mxu0 0.0
    %2184 = vmatprep.subr.mxu0 0.0
    %2185 = vmatpush1.msra.mxu0 0.0
    %2186 = vmatprep.subr.mxu0 0.0
    %2187 = vmatpush1.msra.mxu0 0.0
    %2188 = vmatprep.subr.mxu0 0.0
    %2189 = vmatpush1.msra.mxu0 0.0
    %2190 = vmatprep.subr.mxu0 0.0
    %2191 = vmatpush1.msra.mxu0 0.0
    %2192 = vmatprep.subr.mxu0 0.0
    %2193 = vmatpush1.msra.mxu0 0.0
    %2194 = vmatprep.subr.mxu0 0.0
    %2195 = vmatpush1.msra.mxu0 0.0
    %2196 = vmatprep.subr.mxu0 0.0
    %2197 = vmatpush1.msra.mxu0 0.0
    %2198 = vmatprep.subr.mxu0 0.0
    %2199 = vmatpush1.msra.mxu0 0.0
    %2200 = vmatprep.subr.mxu0 0.0
    %2201 = vmatpush1.msra.mxu0 0.0
    %2202 = vmatprep.subr.mxu0 0.0
    %2203 = vmatpush1.msra.mxu0 0.0
    %2204 = vmatprep.mubr.f32.mxu0 0.0
    %2205 = vmatmul.mubr.f32.gmra.mrb[0].mxu0 %v2129
    %v2206 = vpop.f32.mrb[0].mxu0
    %v2207 = vadd.f32 %v2125, %v2206
    %v2208 = vpop.f32.mrb[0].mxu0
    %2209 = vmatprep.mubr.f32.mxu0 0.0
    %2210 = vmatmul.mubr.f32.gmra.mrb[0].mxu0 %v2132
    %v2211 = vpop.f32.mrb[0].mxu0
    %v2212 = vadd.f32 %v2125, %v2211
    %v2213 = vpop.f32.mrb[0].mxu0
    %2214 = vmatprep.mubr.f32.mxu0 0.0
    %2215 = vmatmul.mubr.f32.gmra.mrb[0].mxu0 %v2135
    %v2216 = vpop.f32.mrb[0].mxu0
    %v2217 = vadd.f32 %v2125, %v2216
    %v2218 = vpop.f32.mrb[0].mxu0
    %2219 = vmatprep.mubr.f32.mxu0 0.0
    %2220 = vmatmul.mubr.f32.gmra.mrb[0].mxu0 %v2138
    %v2221 = vpop.f32.mrb[0].mxu0
    %v2222 = vadd.f32 %v2125, %v2221
    %v2223 = vpop.f32.mrb[0].mxu0
    %2224 = vdwg.mxu0
    %2225 = vst [vmem:[#allocation6] sm:$0xff] %v2207
    %2226 = vst [vmem:[#allocation6 + $0x8] sm:$0xff] %v2212
    %2227 = vst [vmem:[#allocation6 + $0x10] sm:$0xff] %v2217
    %2228 = vst [vmem:[#allocation6 + $0x18] sm:$0xff] %v2222
    // Predicated region
    $region58: #{tpu_custom_call.1} parent=1 // pred_check
      _
    $region59: #{tpu_custom_call.1} parent=1 // pred_check_branch
      %2230 = sbr.rel (0) target = $region61
    $region60: #{tpu_custom_call.1} parent=1 // pred_region
      %s2232 = ssub.s32 512, 512
      %2233 = vsyncadd [#allocation5], %s2232
      %s2234 = sshll.u32 [#allocation6], 4
      %s2235 = int_to_ptr.vmem [resolvable:$true] %s2234
      %2240 = dma.vmem_to_hbm [thread:$0]  %s2235, 512, %s13, [#allocation5], 128, 128, 8
    $region61: #{tpu_custom_call.1} parent=1 // pred_fallthru
      _
    // Predicated region
    $region62: #{tpu_custom_call.1} parent=1 // pred_check
      _
    $region63: #{tpu_custom_call.1} parent=1 // pred_check_branch
      %2242 = sbr.rel (0) target = $region65
    $region64: #{tpu_custom_call.1} parent=1 // pred_region
      %2243 = dma.done [#allocation5], 512
    $region65: #{tpu_custom_call.1} parent=1 // pred_fallthru
      _
    %2244 = vsyncpa [#allocation4], 1
    %2245 = vsyncpa [#allocation5], 1

</llo_original>
